<compile_context>
chip_gen: v7x
topology: tpu7x:2x2x1
jax: 0.10.0
libtpu: 0.0.40
codegen_flags: <defaults>
</compile_context>

<pallas_src>
import math
import functools

import jax
import jax.numpy as jnp
from jax.experimental import pallas as pl
from jax.experimental.pallas import tpu as pltpu


def _layer_norm(h, gamma, beta, eps=1e-5):
    mu = jnp.mean(h, axis=-1, keepdims=True)
    var = jnp.mean(jnp.square(h - mu), axis=-1, keepdims=True)
    return (h - mu) * jax.lax.rsqrt(var + eps) * gamma + beta


def _encoder_block_kernel(lens_ref, x_ref,
                          wq_ref, bq_ref, wk_ref, bk_ref, wv_ref, bv_ref,
                          ws_ref, bs_ref, g1_ref, be1_ref,
                          w1_ref, b1_ref, w2_ref, b2_ref,
                          g2_ref, be2_ref, o_ref,
                          *, num_heads, q_size, k_size, v_size,
                          batch, seq_len, scale):
    B, L, H = batch, seq_len, num_heads
    x = x_ref[...]                                     # (N, D), N = B*L
    N = x.shape[0]

    # --- fused Q/K/V projections for all heads (single lane-dense matmuls) ---
    q = jnp.dot(x, wq_ref[...], preferred_element_type=jnp.float32) + bq_ref[...]
    k = jnp.dot(x, wk_ref[...], preferred_element_type=jnp.float32) + bk_ref[...]
    v = jnp.dot(x, wv_ref[...], preferred_element_type=jnp.float32) + bv_ref[...]

    # --- key-padding mask built in-kernel from SMEM lengths ---------------
    # mask[b, j] = 1.0 if j < input_lengths[b] else 0.0
    col = jax.lax.broadcasted_iota(jnp.int32, (B, L), 1)
    row = jax.lax.broadcasted_iota(jnp.int32, (B, L), 0)
    lens = jnp.zeros((B, L), jnp.int32)
    for b in range(B):                                 # B is tiny; unrolled
        lens = jnp.where(row == b, lens_ref[b], lens)
    mask = (col < lens).astype(jnp.float32)[:, None, :]   # (B, 1, L)

    ws_full = ws_ref[...]                              # (H*dv, D)

    # --- per-head attention, fully unrolled; head-merge accumulated in VMEM ---
    z0 = jnp.zeros((N, ws_full.shape[-1]), jnp.float32)
    for h in range(H):
        qh = q[:, h * q_size:(h + 1) * q_size].reshape(B, L, q_size)
        kh = k[:, h * k_size:(h + 1) * k_size].reshape(B, L, k_size)
        vh = v[:, h * v_size:(h + 1) * v_size].reshape(B, L, v_size)

        s = jnp.einsum('bie,bje->bij', qh, kh,
                       preferred_element_type=jnp.float32) * scale   # (B, L, L)
        s = s * mask                                   # multiplicative key mask

        # Legacy PyTorch default: softmax over dim=0 (batch axis) for 3-D input.
        m = jnp.max(s, axis=0, keepdims=True)
        e = jnp.exp(s - m)
        denom = jnp.sum(e, axis=0, keepdims=True)
        p = e * pl.reciprocal(denom, approx=True)      # EUP reciprocal

        zh = jnp.einsum('bij,bjv->biv', p, vh,
                        preferred_element_type=jnp.float32)           # (B, L, dv)
        # zcat @ Ws  ==  sum_h  zh @ Ws[h*dv:(h+1)*dv, :]  (no lane concat, no
        # narrow HBM stores; attention output never leaves VMEM).
        z0 = z0 + jnp.dot(zh.reshape(N, v_size),
                          ws_full[h * v_size:(h + 1) * v_size, :],
                          preferred_element_type=jnp.float32)
    z0 = z0 + bs_ref[...]

    # --- residual + LN, FFN, residual + LN -------------------------------
    z1 = _layer_norm(z0 + x, g1_ref[...], be1_ref[...])
    hmid = jnp.dot(z1, w1_ref[...], preferred_element_type=jnp.float32) + b1_ref[...]
    hmid = jnp.maximum(hmid, 0.0)                      # ReLU
    z2 = jnp.dot(hmid, w2_ref[...], preferred_element_type=jnp.float32) + b2_ref[...]
    o_ref[...] = _layer_norm(z1 + z2, g2_ref[...], be2_ref[...])


def self_attention_encoder_block(x, input_lengths, params, *,
                                 num_heads, q_size, k_size, v_size):
    """x: (B, L, D) f32; input_lengths: (B,) int; returns (B, L, D) f32."""
    B, L, D = x.shape
    N = B * L
    scale = 1.0 / math.sqrt(k_size)

    kernel = functools.partial(
        _encoder_block_kernel,
        num_heads=num_heads, q_size=q_size, k_size=k_size, v_size=v_size,
        batch=B, seq_len=L, scale=scale)

    vmem = pl.BlockSpec(memory_space=pltpu.MemorySpace.VMEM)
    smem = pl.BlockSpec(memory_space=pltpu.MemorySpace.SMEM)

    # Single fused call, no grid: at these shapes everything (activations,
    # weights, scores) is resident in VMEM on v5e/v6e/v7x.
    # TODO(synk): for large D / L / B*L add a row-tiled grid (and KV tiling)
    # so the FFN weights / O(B*L^2) scores stay within v7x's 64 MiB VMEM.
    out = pl.pallas_call(
        kernel,
        out_shape=jax.ShapeDtypeStruct((N, D), jnp.float32),
        in_specs=[smem] + [vmem] * 17,
        out_specs=vmem,
    )(input_lengths.astype(jnp.int32), x.reshape(N, D),
      params['wq'], params['bq'], params['wk'], params['bk'],
      params['wv'], params['bv'], params['ws'], params['bs'],
      params['g1'], params['be1'], params['w1'], params['b1'],
      params['w2'], params['b2'], params['g2'], params['be2'])

    return out.reshape(B, L, D)


def init_params(key, num_heads, hidden, q_size, k_size, v_size):
    ks = jax.random.split(key, 12)
    s = 0.05
    return {
        # per-head projection weights stacked along output columns
        'wq': jax.random.normal(ks[0], (hidden, num_heads * q_size), jnp.float32) * s,
        'bq': jax.random.normal(ks[1], (1, num_heads * q_size), jnp.float32) * s,
        'wk': jax.random.normal(ks[2], (hidden, num_heads * k_size), jnp.float32) * s,
        'bk': jax.random.normal(ks[3], (1, num_heads * k_size), jnp.float32) * s,
        'wv': jax.random.normal(ks[4], (hidden, num_heads * v_size), jnp.float32) * s,
        'bv': jax.random.normal(ks[5], (1, num_heads * v_size), jnp.float32) * s,
        'ws': jax.random.normal(ks[6], (num_heads * v_size, hidden), jnp.float32) * s,
        'bs': jax.random.normal(ks[7], (1, hidden), jnp.float32) * s,
        'w1': jax.random.normal(ks[8], (hidden, 4 * hidden), jnp.float32) * s,
        'b1': jax.random.normal(ks[9], (1, 4 * hidden), jnp.float32) * s,
        'w2': jax.random.normal(ks[10], (4 * hidden, hidden), jnp.float32) * s,
        'b2': jax.random.normal(ks[11], (1, hidden), jnp.float32) * s,
        # nn.LayerNorm default init: gamma = 1, beta = 0
        'g1': jnp.ones((1, hidden), jnp.float32),
        'be1': jnp.zeros((1, hidden), jnp.float32),
        'g2': jnp.ones((1, hidden), jnp.float32),
        'be2': jnp.zeros((1, hidden), jnp.float32),
    }


if __name__ == "__main__":
    # Small shapes consistent with the module (max_len=8, hidden=32, 4 heads,
    # q = k = v = 8 per head).
    B, L, D = 2, 8, 32
    H, dq, dk, dv = 4, 8, 8, 8

    key = jax.random.PRNGKey(0)
    kx, kp = jax.random.split(key, 2)
    x = jax.random.normal(kx, (B, L, D), jnp.float32)
    params = init_params(kp, H, D, dq, dk, dv)
    input_lengths = jnp.array([8, 5], dtype=jnp.int32)

    out = self_attention_encoder_block(x, input_lengths, params,
                                       num_heads=H, q_size=dq, k_size=dk, v_size=dv)
    jax.block_until_ready(out)
    assert out.shape == (B, L, D) and out.dtype == jnp.float32
    print("KERNEL_OK")
</pallas_src>

<mosaic_0001>
module attributes {stable_mosaic.version = 11 : i64} {
  func.func @_encoder_block_kernel(%arg0: memref<2xi32, #tpu.memory_space<smem>>, %arg1: memref<16x32xf32, #tpu.memory_space<vmem>>, %arg2: memref<32x32xf32, #tpu.memory_space<vmem>>, %arg3: memref<1x32xf32, #tpu.memory_space<vmem>>, %arg4: memref<32x32xf32, #tpu.memory_space<vmem>>, %arg5: memref<1x32xf32, #tpu.memory_space<vmem>>, %arg6: memref<32x32xf32, #tpu.memory_space<vmem>>, %arg7: memref<1x32xf32, #tpu.memory_space<vmem>>, %arg8: memref<32x32xf32, #tpu.memory_space<vmem>>, %arg9: memref<1x32xf32, #tpu.memory_space<vmem>>, %arg10: memref<1x32xf32, #tpu.memory_space<vmem>>, %arg11: memref<1x32xf32, #tpu.memory_space<vmem>>, %arg12: memref<32x128xf32, #tpu.memory_space<vmem>>, %arg13: memref<1x128xf32, #tpu.memory_space<vmem>>, %arg14: memref<128x32xf32, #tpu.memory_space<vmem>>, %arg15: memref<1x32xf32, #tpu.memory_space<vmem>>, %arg16: memref<1x32xf32, #tpu.memory_space<vmem>>, %arg17: memref<1x32xf32, #tpu.memory_space<vmem>>, %arg18: memref<16x32xf32, #tpu.memory_space<vmem>>) attributes {dimension_semantics = [], scalar_prefetch = 0 : i64, scratch_operands = 0 : i64, tpu.core_type = #tpu.core_type<tc>} {
    %c0 = arith.constant 0 : index
    %c0_0 = arith.constant 0 : index
    %0 = vector.load %arg1[%c0, %c0_0] : memref<16x32xf32, #tpu.memory_space<vmem>>, vector<16x32xf32>
    %c0_1 = arith.constant 0 : index
    %c0_2 = arith.constant 0 : index
    %1 = vector.load %arg2[%c0_1, %c0_2] : memref<32x32xf32, #tpu.memory_space<vmem>>, vector<32x32xf32>
    %cst = arith.constant dense<0.000000e+00> : vector<16x32xf32>
    %2 = tpu.matmul %0, %1, %cst {dimension_numbers = #tpu.dot_dimension_numbers<[1], [0], [0], [1], [0, 0, 1, 1], [], []>} : vector<16x32xf32>, vector<32x32xf32>, vector<16x32xf32> -> vector<16x32xf32>
    %c0_3 = arith.constant 0 : index
    %c0_4 = arith.constant 0 : index
    %3 = vector.load %arg3[%c0_3, %c0_4] : memref<1x32xf32, #tpu.memory_space<vmem>>, vector<1x32xf32>
    %4 = vector.broadcast %3 : vector<1x32xf32> to vector<16x32xf32>
    %5 = arith.addf %2, %4 : vector<16x32xf32>
    %c0_5 = arith.constant 0 : index
    %c0_6 = arith.constant 0 : index
    %6 = vector.load %arg4[%c0_5, %c0_6] : memref<32x32xf32, #tpu.memory_space<vmem>>, vector<32x32xf32>
    %cst_7 = arith.constant dense<0.000000e+00> : vector<16x32xf32>
    %7 = tpu.matmul %0, %6, %cst_7 {dimension_numbers = #tpu.dot_dimension_numbers<[1], [0], [0], [1], [0, 0, 1, 1], [], []>} : vector<16x32xf32>, vector<32x32xf32>, vector<16x32xf32> -> vector<16x32xf32>
    %c0_8 = arith.constant 0 : index
    %c0_9 = arith.constant 0 : index
    %8 = vector.load %arg5[%c0_8, %c0_9] : memref<1x32xf32, #tpu.memory_space<vmem>>, vector<1x32xf32>
    %9 = vector.broadcast %8 : vector<1x32xf32> to vector<16x32xf32>
    %10 = arith.addf %7, %9 : vector<16x32xf32>
    %c0_10 = arith.constant 0 : index
    %c0_11 = arith.constant 0 : index
    %11 = vector.load %arg6[%c0_10, %c0_11] : memref<32x32xf32, #tpu.memory_space<vmem>>, vector<32x32xf32>
    %cst_12 = arith.constant dense<0.000000e+00> : vector<16x32xf32>
    %12 = tpu.matmul %0, %11, %cst_12 {dimension_numbers = #tpu.dot_dimension_numbers<[1], [0], [0], [1], [0, 0, 1, 1], [], []>} : vector<16x32xf32>, vector<32x32xf32>, vector<16x32xf32> -> vector<16x32xf32>
    %c0_13 = arith.constant 0 : index
    %c0_14 = arith.constant 0 : index
    %13 = vector.load %arg7[%c0_13, %c0_14] : memref<1x32xf32, #tpu.memory_space<vmem>>, vector<1x32xf32>
    %14 = vector.broadcast %13 : vector<1x32xf32> to vector<16x32xf32>
    %15 = arith.addf %12, %14 : vector<16x32xf32>
    %16 = tpu.iota {dimensions = array<i32: 1>} : vector<2x8xi32>
    %17 = tpu.iota {dimensions = array<i32: 0>} : vector<2x8xi32>
    %c0_i32 = arith.constant 0 : i32
    %18 = vector.broadcast %c0_i32 : i32 to vector<2x8xi32>
    %c0_i32_15 = arith.constant 0 : i32
    %19 = vector.broadcast %c0_i32_15 : i32 to vector<2x8xi32>
    %20 = arith.cmpi eq, %17, %19 : vector<2x8xi32>
    %c0_16 = arith.constant 0 : index
    %21 = memref.load %arg0[%c0_16] : memref<2xi32, #tpu.memory_space<smem>>
    %22 = vector.broadcast %21 : i32 to vector<2x8xi32>
    %23 = arith.select %20, %22, %18 : vector<2x8xi1>, vector<2x8xi32>
    %c1_i32 = arith.constant 1 : i32
    %24 = vector.broadcast %c1_i32 : i32 to vector<2x8xi32>
    %25 = arith.cmpi eq, %17, %24 : vector<2x8xi32>
    %c1 = arith.constant 1 : index
    %26 = memref.load %arg0[%c1] : memref<2xi32, #tpu.memory_space<smem>>
    %27 = vector.broadcast %26 : i32 to vector<2x8xi32>
    %28 = arith.select %25, %27, %23 : vector<2x8xi1>, vector<2x8xi32>
    %29 = arith.cmpi slt, %16, %28 : vector<2x8xi32>
    %30 = arith.extui %29 : vector<2x8xi1> to vector<2x8xi32>
    %31 = arith.sitofp %30 : vector<2x8xi32> to vector<2x8xf32>
    %32 = vector.shape_cast %31 : vector<2x8xf32> to vector<2x1x8xf32>
    %c0_17 = arith.constant 0 : index
    %c0_18 = arith.constant 0 : index
    %33 = vector.load %arg8[%c0_17, %c0_18] : memref<32x32xf32, #tpu.memory_space<vmem>>, vector<32x32xf32>
    %cst_19 = arith.constant 0.000000e+00 : f32
    %34 = vector.broadcast %cst_19 : f32 to vector<16x32xf32>
    %35 = vector.extract_strided_slice %5 {offsets = [0, 0], sizes = [16, 8], strides = [1, 1]} : vector<16x32xf32> to vector<16x8xf32>
    %36 = vector.shape_cast %35 : vector<16x8xf32> to vector<2x8x8xf32>
    %37 = vector.extract_strided_slice %10 {offsets = [0, 0], sizes = [16, 8], strides = [1, 1]} : vector<16x32xf32> to vector<16x8xf32>
    %38 = vector.shape_cast %37 : vector<16x8xf32> to vector<2x8x8xf32>
    %39 = vector.extract_strided_slice %15 {offsets = [0, 0], sizes = [16, 8], strides = [1, 1]} : vector<16x32xf32> to vector<16x8xf32>
    %40 = vector.shape_cast %39 : vector<16x8xf32> to vector<2x8x8xf32>
    "tpu.trace_start"() <{level = 10 : i32, message = "bie,bje->bij"}> : () -> ()
    %cst_20 = arith.constant dense<0.000000e+00> : vector<2x8x8xf32>
    %41 = tpu.matmul %36, %38, %cst_20 {dimension_numbers = #tpu.dot_dimension_numbers<[2], [2], [1], [1], [0, 0, 0, 1, 1, 1], [0], [0]>} : vector<2x8x8xf32>, vector<2x8x8xf32>, vector<2x8x8xf32> -> vector<2x8x8xf32>
    "tpu.trace_stop"() : () -> ()
    %cst_21 = arith.constant 0.353553385 : f32
    %42 = vector.broadcast %cst_21 : f32 to vector<2x8x8xf32>
    %43 = arith.mulf %41, %42 : vector<2x8x8xf32>
    %44 = vector.broadcast %32 : vector<2x1x8xf32> to vector<2x8x8xf32>
    %45 = arith.mulf %43, %44 : vector<2x8x8xf32>
    %cst_22 = arith.constant dense<0xFF800000> : vector<8x8xf32>
    %46 = vector.multi_reduction <maximumf>, %45, %cst_22 [0] : vector<2x8x8xf32> to vector<8x8xf32>
    %47 = vector.shape_cast %46 : vector<8x8xf32> to vector<1x8x8xf32>
    %48 = vector.broadcast %47 : vector<1x8x8xf32> to vector<2x8x8xf32>
    %49 = arith.subf %45, %48 : vector<2x8x8xf32>
    %50 = math.exp %49 : vector<2x8x8xf32>
    %cst_23 = arith.constant dense<0.000000e+00> : vector<8x8xf32>
    %51 = vector.multi_reduction <add>, %50, %cst_23 [0] : vector<2x8x8xf32> to vector<8x8xf32>
    %52 = vector.shape_cast %51 : vector<8x8xf32> to vector<1x8x8xf32>
    %53 = tpu.reciprocal %52 {approx = true} : vector<1x8x8xf32> -> vector<1x8x8xf32>
    %54 = vector.broadcast %53 : vector<1x8x8xf32> to vector<2x8x8xf32>
    %55 = arith.mulf %50, %54 : vector<2x8x8xf32>
    "tpu.trace_start"() <{level = 10 : i32, message = "bij,bjv->biv"}> : () -> ()
    %cst_24 = arith.constant dense<0.000000e+00> : vector<2x8x8xf32>
    %56 = tpu.matmul %55, %40, %cst_24 {dimension_numbers = #tpu.dot_dimension_numbers<[2], [1], [1], [2], [0, 0, 0, 1, 1, 2], [0], [0]>} : vector<2x8x8xf32>, vector<2x8x8xf32>, vector<2x8x8xf32> -> vector<2x8x8xf32>
    "tpu.trace_stop"() : () -> ()
    %57 = vector.shape_cast %56 : vector<2x8x8xf32> to vector<16x8xf32>
    %58 = vector.extract_strided_slice %33 {offsets = [0, 0], sizes = [8, 32], strides = [1, 1]} : vector<32x32xf32> to vector<8x32xf32>
    %cst_25 = arith.constant dense<0.000000e+00> : vector<16x32xf32>
    %59 = tpu.matmul %57, %58, %cst_25 {dimension_numbers = #tpu.dot_dimension_numbers<[1], [0], [0], [1], [0, 0, 1, 1], [], []>} : vector<16x8xf32>, vector<8x32xf32>, vector<16x32xf32> -> vector<16x32xf32>
    %60 = arith.addf %34, %59 : vector<16x32xf32>
    %61 = vector.extract_strided_slice %5 {offsets = [0, 8], sizes = [16, 8], strides = [1, 1]} : vector<16x32xf32> to vector<16x8xf32>
    %62 = vector.shape_cast %61 : vector<16x8xf32> to vector<2x8x8xf32>
    %63 = vector.extract_strided_slice %10 {offsets = [0, 8], sizes = [16, 8], strides = [1, 1]} : vector<16x32xf32> to vector<16x8xf32>
    %64 = vector.shape_cast %63 : vector<16x8xf32> to vector<2x8x8xf32>
    %65 = vector.extract_strided_slice %15 {offsets = [0, 8], sizes = [16, 8], strides = [1, 1]} : vector<16x32xf32> to vector<16x8xf32>
    %66 = vector.shape_cast %65 : vector<16x8xf32> to vector<2x8x8xf32>
    "tpu.trace_start"() <{level = 10 : i32, message = "bie,bje->bij"}> : () -> ()
    %cst_26 = arith.constant dense<0.000000e+00> : vector<2x8x8xf32>
    %67 = tpu.matmul %62, %64, %cst_26 {dimension_numbers = #tpu.dot_dimension_numbers<[2], [2], [1], [1], [0, 0, 0, 1, 1, 1], [0], [0]>} : vector<2x8x8xf32>, vector<2x8x8xf32>, vector<2x8x8xf32> -> vector<2x8x8xf32>
    "tpu.trace_stop"() : () -> ()
    %cst_27 = arith.constant 0.353553385 : f32
    %68 = vector.broadcast %cst_27 : f32 to vector<2x8x8xf32>
    %69 = arith.mulf %67, %68 : vector<2x8x8xf32>
    %70 = vector.broadcast %32 : vector<2x1x8xf32> to vector<2x8x8xf32>
    %71 = arith.mulf %69, %70 : vector<2x8x8xf32>
    %cst_28 = arith.constant dense<0xFF800000> : vector<8x8xf32>
    %72 = vector.multi_reduction <maximumf>, %71, %cst_28 [0] : vector<2x8x8xf32> to vector<8x8xf32>
    %73 = vector.shape_cast %72 : vector<8x8xf32> to vector<1x8x8xf32>
    %74 = vector.broadcast %73 : vector<1x8x8xf32> to vector<2x8x8xf32>
    %75 = arith.subf %71, %74 : vector<2x8x8xf32>
    %76 = math.exp %75 : vector<2x8x8xf32>
    %cst_29 = arith.constant dense<0.000000e+00> : vector<8x8xf32>
    %77 = vector.multi_reduction <add>, %76, %cst_29 [0] : vector<2x8x8xf32> to vector<8x8xf32>
    %78 = vector.shape_cast %77 : vector<8x8xf32> to vector<1x8x8xf32>
    %79 = tpu.reciprocal %78 {approx = true} : vector<1x8x8xf32> -> vector<1x8x8xf32>
    %80 = vector.broadcast %79 : vector<1x8x8xf32> to vector<2x8x8xf32>
    %81 = arith.mulf %76, %80 : vector<2x8x8xf32>
    "tpu.trace_start"() <{level = 10 : i32, message = "bij,bjv->biv"}> : () -> ()
    %cst_30 = arith.constant dense<0.000000e+00> : vector<2x8x8xf32>
    %82 = tpu.matmul %81, %66, %cst_30 {dimension_numbers = #tpu.dot_dimension_numbers<[2], [1], [1], [2], [0, 0, 0, 1, 1, 2], [0], [0]>} : vector<2x8x8xf32>, vector<2x8x8xf32>, vector<2x8x8xf32> -> vector<2x8x8xf32>
    "tpu.trace_stop"() : () -> ()
    %83 = vector.shape_cast %82 : vector<2x8x8xf32> to vector<16x8xf32>
    %84 = vector.extract_strided_slice %33 {offsets = [8, 0], sizes = [8, 32], strides = [1, 1]} : vector<32x32xf32> to vector<8x32xf32>
    %cst_31 = arith.constant dense<0.000000e+00> : vector<16x32xf32>
    %85 = tpu.matmul %83, %84, %cst_31 {dimension_numbers = #tpu.dot_dimension_numbers<[1], [0], [0], [1], [0, 0, 1, 1], [], []>} : vector<16x8xf32>, vector<8x32xf32>, vector<16x32xf32> -> vector<16x32xf32>
    %86 = arith.addf %60, %85 : vector<16x32xf32>
    %87 = vector.extract_strided_slice %5 {offsets = [0, 16], sizes = [16, 8], strides = [1, 1]} : vector<16x32xf32> to vector<16x8xf32>
    %88 = vector.shape_cast %87 : vector<16x8xf32> to vector<2x8x8xf32>
    %89 = vector.extract_strided_slice %10 {offsets = [0, 16], sizes = [16, 8], strides = [1, 1]} : vector<16x32xf32> to vector<16x8xf32>
    %90 = vector.shape_cast %89 : vector<16x8xf32> to vector<2x8x8xf32>
    %91 = vector.extract_strided_slice %15 {offsets = [0, 16], sizes = [16, 8], strides = [1, 1]} : vector<16x32xf32> to vector<16x8xf32>
    %92 = vector.shape_cast %91 : vector<16x8xf32> to vector<2x8x8xf32>
    "tpu.trace_start"() <{level = 10 : i32, message = "bie,bje->bij"}> : () -> ()
    %cst_32 = arith.constant dense<0.000000e+00> : vector<2x8x8xf32>
    %93 = tpu.matmul %88, %90, %cst_32 {dimension_numbers = #tpu.dot_dimension_numbers<[2], [2], [1], [1], [0, 0, 0, 1, 1, 1], [0], [0]>} : vector<2x8x8xf32>, vector<2x8x8xf32>, vector<2x8x8xf32> -> vector<2x8x8xf32>
    "tpu.trace_stop"() : () -> ()
    %cst_33 = arith.constant 0.353553385 : f32
    %94 = vector.broadcast %cst_33 : f32 to vector<2x8x8xf32>
    %95 = arith.mulf %93, %94 : vector<2x8x8xf32>
    %96 = vector.broadcast %32 : vector<2x1x8xf32> to vector<2x8x8xf32>
    %97 = arith.mulf %95, %96 : vector<2x8x8xf32>
    %cst_34 = arith.constant dense<0xFF800000> : vector<8x8xf32>
    %98 = vector.multi_reduction <maximumf>, %97, %cst_34 [0] : vector<2x8x8xf32> to vector<8x8xf32>
    %99 = vector.shape_cast %98 : vector<8x8xf32> to vector<1x8x8xf32>
    %100 = vector.broadcast %99 : vector<1x8x8xf32> to vector<2x8x8xf32>
    %101 = arith.subf %97, %100 : vector<2x8x8xf32>
    %102 = math.exp %101 : vector<2x8x8xf32>
    %cst_35 = arith.constant dense<0.000000e+00> : vector<8x8xf32>
    %103 = vector.multi_reduction <add>, %102, %cst_35 [0] : vector<2x8x8xf32> to vector<8x8xf32>
    %104 = vector.shape_cast %103 : vector<8x8xf32> to vector<1x8x8xf32>
    %105 = tpu.reciprocal %104 {approx = true} : vector<1x8x8xf32> -> vector<1x8x8xf32>
    %106 = vector.broadcast %105 : vector<1x8x8xf32> to vector<2x8x8xf32>
    %107 = arith.mulf %102, %106 : vector<2x8x8xf32>
    "tpu.trace_start"() <{level = 10 : i32, message = "bij,bjv->biv"}> : () -> ()
    %cst_36 = arith.constant dense<0.000000e+00> : vector<2x8x8xf32>
    %108 = tpu.matmul %107, %92, %cst_36 {dimension_numbers = #tpu.dot_dimension_numbers<[2], [1], [1], [2], [0, 0, 0, 1, 1, 2], [0], [0]>} : vector<2x8x8xf32>, vector<2x8x8xf32>, vector<2x8x8xf32> -> vector<2x8x8xf32>
    "tpu.trace_stop"() : () -> ()
    %109 = vector.shape_cast %108 : vector<2x8x8xf32> to vector<16x8xf32>
    %110 = vector.extract_strided_slice %33 {offsets = [16, 0], sizes = [8, 32], strides = [1, 1]} : vector<32x32xf32> to vector<8x32xf32>
    %cst_37 = arith.constant dense<0.000000e+00> : vector<16x32xf32>
    %111 = tpu.matmul %109, %110, %cst_37 {dimension_numbers = #tpu.dot_dimension_numbers<[1], [0], [0], [1], [0, 0, 1, 1], [], []>} : vector<16x8xf32>, vector<8x32xf32>, vector<16x32xf32> -> vector<16x32xf32>
    %112 = arith.addf %86, %111 : vector<16x32xf32>
    %113 = vector.extract_strided_slice %5 {offsets = [0, 24], sizes = [16, 8], strides = [1, 1]} : vector<16x32xf32> to vector<16x8xf32>
    %114 = vector.shape_cast %113 : vector<16x8xf32> to vector<2x8x8xf32>
    %115 = vector.extract_strided_slice %10 {offsets = [0, 24], sizes = [16, 8], strides = [1, 1]} : vector<16x32xf32> to vector<16x8xf32>
    %116 = vector.shape_cast %115 : vector<16x8xf32> to vector<2x8x8xf32>
    %117 = vector.extract_strided_slice %15 {offsets = [0, 24], sizes = [16, 8], strides = [1, 1]} : vector<16x32xf32> to vector<16x8xf32>
    %118 = vector.shape_cast %117 : vector<16x8xf32> to vector<2x8x8xf32>
    "tpu.trace_start"() <{level = 10 : i32, message = "bie,bje->bij"}> : () -> ()
    %cst_38 = arith.constant dense<0.000000e+00> : vector<2x8x8xf32>
    %119 = tpu.matmul %114, %116, %cst_38 {dimension_numbers = #tpu.dot_dimension_numbers<[2], [2], [1], [1], [0, 0, 0, 1, 1, 1], [0], [0]>} : vector<2x8x8xf32>, vector<2x8x8xf32>, vector<2x8x8xf32> -> vector<2x8x8xf32>
    "tpu.trace_stop"() : () -> ()
    %cst_39 = arith.constant 0.353553385 : f32
    %120 = vector.broadcast %cst_39 : f32 to vector<2x8x8xf32>
    %121 = arith.mulf %119, %120 : vector<2x8x8xf32>
    %122 = vector.broadcast %32 : vector<2x1x8xf32> to vector<2x8x8xf32>
    %123 = arith.mulf %121, %122 : vector<2x8x8xf32>
    %cst_40 = arith.constant dense<0xFF800000> : vector<8x8xf32>
    %124 = vector.multi_reduction <maximumf>, %123, %cst_40 [0] : vector<2x8x8xf32> to vector<8x8xf32>
    %125 = vector.shape_cast %124 : vector<8x8xf32> to vector<1x8x8xf32>
    %126 = vector.broadcast %125 : vector<1x8x8xf32> to vector<2x8x8xf32>
    %127 = arith.subf %123, %126 : vector<2x8x8xf32>
    %128 = math.exp %127 : vector<2x8x8xf32>
    %cst_41 = arith.constant dense<0.000000e+00> : vector<8x8xf32>
    %129 = vector.multi_reduction <add>, %128, %cst_41 [0] : vector<2x8x8xf32> to vector<8x8xf32>
    %130 = vector.shape_cast %129 : vector<8x8xf32> to vector<1x8x8xf32>
    %131 = tpu.reciprocal %130 {approx = true} : vector<1x8x8xf32> -> vector<1x8x8xf32>
    %132 = vector.broadcast %131 : vector<1x8x8xf32> to vector<2x8x8xf32>
    %133 = arith.mulf %128, %132 : vector<2x8x8xf32>
    "tpu.trace_start"() <{level = 10 : i32, message = "bij,bjv->biv"}> : () -> ()
    %cst_42 = arith.constant dense<0.000000e+00> : vector<2x8x8xf32>
    %134 = tpu.matmul %133, %118, %cst_42 {dimension_numbers = #tpu.dot_dimension_numbers<[2], [1], [1], [2], [0, 0, 0, 1, 1, 2], [0], [0]>} : vector<2x8x8xf32>, vector<2x8x8xf32>, vector<2x8x8xf32> -> vector<2x8x8xf32>
    "tpu.trace_stop"() : () -> ()
    %135 = vector.shape_cast %134 : vector<2x8x8xf32> to vector<16x8xf32>
    %136 = vector.extract_strided_slice %33 {offsets = [24, 0], sizes = [8, 32], strides = [1, 1]} : vector<32x32xf32> to vector<8x32xf32>
    %cst_43 = arith.constant dense<0.000000e+00> : vector<16x32xf32>
    %137 = tpu.matmul %135, %136, %cst_43 {dimension_numbers = #tpu.dot_dimension_numbers<[1], [0], [0], [1], [0, 0, 1, 1], [], []>} : vector<16x8xf32>, vector<8x32xf32>, vector<16x32xf32> -> vector<16x32xf32>
    %138 = arith.addf %112, %137 : vector<16x32xf32>
    %c0_44 = arith.constant 0 : index
    %c0_45 = arith.constant 0 : index
    %139 = vector.load %arg9[%c0_44, %c0_45] : memref<1x32xf32, #tpu.memory_space<vmem>>, vector<1x32xf32>
    %140 = vector.broadcast %139 : vector<1x32xf32> to vector<16x32xf32>
    %141 = arith.addf %138, %140 : vector<16x32xf32>
    %142 = arith.addf %141, %0 : vector<16x32xf32>
    %c0_46 = arith.constant 0 : index
    %c0_47 = arith.constant 0 : index
    %143 = vector.load %arg10[%c0_46, %c0_47] : memref<1x32xf32, #tpu.memory_space<vmem>>, vector<1x32xf32>
    %c0_48 = arith.constant 0 : index
    %c0_49 = arith.constant 0 : index
    %144 = vector.load %arg11[%c0_48, %c0_49] : memref<1x32xf32, #tpu.memory_space<vmem>>, vector<1x32xf32>
    %cst_50 = arith.constant dense<0.000000e+00> : vector<16xf32>
    %145 = vector.multi_reduction <add>, %142, %cst_50 [1] : vector<16x32xf32> to vector<16xf32>
    %146 = vector.shape_cast %145 : vector<16xf32> to vector<16x1xf32>
    %cst_51 = arith.constant 3.200000e+01 : f32
    %147 = vector.broadcast %cst_51 : f32 to vector<16x1xf32>
    %148 = arith.divf %146, %147 : vector<16x1xf32>
    %149 = vector.broadcast %148 : vector<16x1xf32> to vector<16x32xf32>
    %150 = arith.subf %142, %149 : vector<16x32xf32>
    %151 = arith.mulf %150, %150 : vector<16x32xf32>
    %cst_52 = arith.constant dense<0.000000e+00> : vector<16xf32>
    %152 = vector.multi_reduction <add>, %151, %cst_52 [1] : vector<16x32xf32> to vector<16xf32>
    %153 = vector.shape_cast %152 : vector<16xf32> to vector<16x1xf32>
    %cst_53 = arith.constant 3.200000e+01 : f32
    %154 = vector.broadcast %cst_53 : f32 to vector<16x1xf32>
    %155 = arith.divf %153, %154 : vector<16x1xf32>
    %156 = vector.broadcast %148 : vector<16x1xf32> to vector<16x32xf32>
    %157 = arith.subf %142, %156 : vector<16x32xf32>
    %cst_54 = arith.constant 9.99999974E-6 : f32
    %158 = vector.broadcast %cst_54 : f32 to vector<16x1xf32>
    %159 = arith.addf %155, %158 : vector<16x1xf32>
    %160 = math.rsqrt %159 : vector<16x1xf32>
    %161 = vector.broadcast %160 : vector<16x1xf32> to vector<16x32xf32>
    %162 = arith.mulf %157, %161 : vector<16x32xf32>
    %163 = vector.broadcast %143 : vector<1x32xf32> to vector<16x32xf32>
    %164 = arith.mulf %162, %163 : vector<16x32xf32>
    %165 = vector.broadcast %144 : vector<1x32xf32> to vector<16x32xf32>
    %166 = arith.addf %164, %165 : vector<16x32xf32>
    %c0_55 = arith.constant 0 : index
    %c0_56 = arith.constant 0 : index
    %167 = vector.load %arg12[%c0_55, %c0_56] : memref<32x128xf32, #tpu.memory_space<vmem>>, vector<32x128xf32>
    %cst_57 = arith.constant dense<0.000000e+00> : vector<16x128xf32>
    %168 = tpu.matmul %166, %167, %cst_57 {dimension_numbers = #tpu.dot_dimension_numbers<[1], [0], [0], [1], [0, 0, 1, 1], [], []>} : vector<16x32xf32>, vector<32x128xf32>, vector<16x128xf32> -> vector<16x128xf32>
    %c0_58 = arith.constant 0 : index
    %c0_59 = arith.constant 0 : index
    %169 = vector.load %arg13[%c0_58, %c0_59] : memref<1x128xf32, #tpu.memory_space<vmem>>, vector<1x128xf32>
    %170 = vector.broadcast %169 : vector<1x128xf32> to vector<16x128xf32>
    %171 = arith.addf %168, %170 : vector<16x128xf32>
    %cst_60 = arith.constant 0.000000e+00 : f32
    %172 = vector.broadcast %cst_60 : f32 to vector<16x128xf32>
    %173 = arith.maximumf %171, %172 : vector<16x128xf32>
    %c0_61 = arith.constant 0 : index
    %c0_62 = arith.constant 0 : index
    %174 = vector.load %arg14[%c0_61, %c0_62] : memref<128x32xf32, #tpu.memory_space<vmem>>, vector<128x32xf32>
    %cst_63 = arith.constant dense<0.000000e+00> : vector<16x32xf32>
    %175 = tpu.matmul %173, %174, %cst_63 {dimension_numbers = #tpu.dot_dimension_numbers<[1], [0], [0], [1], [0, 0, 1, 1], [], []>} : vector<16x128xf32>, vector<128x32xf32>, vector<16x32xf32> -> vector<16x32xf32>
    %c0_64 = arith.constant 0 : index
    %c0_65 = arith.constant 0 : index
    %176 = vector.load %arg15[%c0_64, %c0_65] : memref<1x32xf32, #tpu.memory_space<vmem>>, vector<1x32xf32>
    %177 = vector.broadcast %176 : vector<1x32xf32> to vector<16x32xf32>
    %178 = arith.addf %175, %177 : vector<16x32xf32>
    %179 = arith.addf %166, %178 : vector<16x32xf32>
    %c0_66 = arith.constant 0 : index
    %c0_67 = arith.constant 0 : index
    %180 = vector.load %arg16[%c0_66, %c0_67] : memref<1x32xf32, #tpu.memory_space<vmem>>, vector<1x32xf32>
    %c0_68 = arith.constant 0 : index
    %c0_69 = arith.constant 0 : index
    %181 = vector.load %arg17[%c0_68, %c0_69] : memref<1x32xf32, #tpu.memory_space<vmem>>, vector<1x32xf32>
    %cst_70 = arith.constant dense<0.000000e+00> : vector<16xf32>
    %182 = vector.multi_reduction <add>, %179, %cst_70 [1] : vector<16x32xf32> to vector<16xf32>
    %183 = vector.shape_cast %182 : vector<16xf32> to vector<16x1xf32>
    %cst_71 = arith.constant 3.200000e+01 : f32
    %184 = vector.broadcast %cst_71 : f32 to vector<16x1xf32>
    %185 = arith.divf %183, %184 : vector<16x1xf32>
    %186 = vector.broadcast %185 : vector<16x1xf32> to vector<16x32xf32>
    %187 = arith.subf %179, %186 : vector<16x32xf32>
    %188 = arith.mulf %187, %187 : vector<16x32xf32>
    %cst_72 = arith.constant dense<0.000000e+00> : vector<16xf32>
    %189 = vector.multi_reduction <add>, %188, %cst_72 [1] : vector<16x32xf32> to vector<16xf32>
    %190 = vector.shape_cast %189 : vector<16xf32> to vector<16x1xf32>
    %cst_73 = arith.constant 3.200000e+01 : f32
    %191 = vector.broadcast %cst_73 : f32 to vector<16x1xf32>
    %192 = arith.divf %190, %191 : vector<16x1xf32>
    %193 = vector.broadcast %185 : vector<16x1xf32> to vector<16x32xf32>
    %194 = arith.subf %179, %193 : vector<16x32xf32>
    %cst_74 = arith.constant 9.99999974E-6 : f32
    %195 = vector.broadcast %cst_74 : f32 to vector<16x1xf32>
    %196 = arith.addf %192, %195 : vector<16x1xf32>
    %197 = math.rsqrt %196 : vector<16x1xf32>
    %198 = vector.broadcast %197 : vector<16x1xf32> to vector<16x32xf32>
    %199 = arith.mulf %194, %198 : vector<16x32xf32>
    %200 = vector.broadcast %180 : vector<1x32xf32> to vector<16x32xf32>
    %201 = arith.mulf %199, %200 : vector<16x32xf32>
    %202 = vector.broadcast %181 : vector<1x32xf32> to vector<16x32xf32>
    %203 = arith.addf %201, %202 : vector<16x32xf32>
    %c0_75 = arith.constant 0 : index
    %c0_76 = arith.constant 0 : index
    %204 = vector.load %arg18[%c0_75, %c0_76] : memref<16x32xf32, #tpu.memory_space<vmem>>, vector<16x32xf32>
    tpu.vector_store %arg18[%c0_75, %c0_76], %203 {strides = array<i32>} : memref<16x32xf32, #tpu.memory_space<vmem>>, vector<16x32xf32>,
    return
  }
}

</mosaic_0001>

<llo_original>
// kernel: tpu_custom_call.1
$region0: #{tpu_custom_call.1}
  #allocation0 [shape = 'u32[]', space=smem, size = 0x4, offset = 0x4, fixed_abs, tag = 'smem constant byte address 0x4 - core index']
  #allocation1 [shape = 'u32[144,128]{1,0:T(1,128)}', space=vmem, size = 0x12000, scoped, tag = 'internal scratch']
  %s0 = inlined_call_operand.hbm [shape: s32[2], index: 0, kind: input, shape index: {}]
  %s1 = inlined_call_operand.hbm [shape: f32[16,32], index: 1, kind: input, shape index: {}]
  %s2 = inlined_call_operand.vmem [shape: f32[32,32], index: 2, kind: input, shape index: {}]
  %s3 = inlined_call_operand.vmem [shape: f32[1,32], index: 3, kind: input, shape index: {}]
  %s4 = inlined_call_operand.vmem [shape: f32[32,32], index: 4, kind: input, shape index: {}]
  %s5 = inlined_call_operand.vmem [shape: f32[1,32], index: 5, kind: input, shape index: {}]
  %s6 = inlined_call_operand.vmem [shape: f32[32,32], index: 6, kind: input, shape index: {}]
  %s7 = inlined_call_operand.vmem [shape: f32[1,32], index: 7, kind: input, shape index: {}]
  %s8 = inlined_call_operand.vmem [shape: f32[32,32], index: 8, kind: input, shape index: {}]
  %s9 = inlined_call_operand.vmem [shape: f32[1,32], index: 9, kind: input, shape index: {}]
  %s10 = inlined_call_operand.vmem [shape: f32[1,32], index: 10, kind: input, shape index: {}]
  %s11 = inlined_call_operand.vmem [shape: f32[1,32], index: 11, kind: input, shape index: {}]
  %s12 = inlined_call_operand.vmem [shape: f32[32,128], index: 12, kind: input, shape index: {}]
  %s13 = inlined_call_operand.vmem [shape: f32[1,128], index: 13, kind: input, shape index: {}]
  %s14 = inlined_call_operand.vmem [shape: f32[128,32], index: 14, kind: input, shape index: {}]
  %s15 = inlined_call_operand.vmem [shape: f32[1,32], index: 15, kind: input, shape index: {}]
  %s16 = inlined_call_operand.vmem [shape: f32[1,32], index: 16, kind: input, shape index: {}]
  %s17 = inlined_call_operand.vmem [shape: f32[1,32], index: 17, kind: input, shape index: {}]
  %s18 = inlined_call_operand.hbm [shape: f32[16,32], index: 18, kind: output, shape index: {}]
  %s19 = sld [smem:[#allocation0]]
  $region90: #{tpu_custom_call.1} parent=0
    _
  %s21 = ssub.s32 1, %s19
  %s22 = scalar_select 0, %s21, %s19
  $region1: #{tpu_custom_call.1} parent=0
    #allocation2 [shape = 'u8[512]{0}', space=smem, size = 0x200, scoped, tag = 'input window, operand 0, single buffered']
    #allocation3 [shape = 's32[1]{0}', space=sflag, size = 0x4, scoped, tag = 'scoped memory for tpu_custom_call.1']
    #allocation4 [shape = 's32[1]{0}', space=sflag, size = 0x4, scoped, tag = 'scoped memory for tpu_custom_call.1']
    #allocation5 [shape = 's32[1]{0}', space=sflag, size = 0x4, scoped, tag = 'scoped memory for tpu_custom_call.1']
    #allocation6 [shape = 'u8[8192]{0}', space=vmem, size = 0x2000, scoped, tag = 'input window, operand 1, single buffered']
    #allocation7 [shape = 'u8[8192]{0}', space=vmem, size = 0x2000, scoped, tag = 'output window, operand 0, single buffered']
    %23 = vsyncpa [#allocation5], 0
    %24 = vsyncpa [#allocation3], 0
    %25 = vsyncpa [#allocation4], 0
    // Predicated region
    $region2: #{tpu_custom_call.1} parent=1 // pred_check
      _
    $region3: #{tpu_custom_call.1} parent=1 // pred_check_branch
      %27 = sbr.rel (0) target = $region5
    $region4: #{tpu_custom_call.1} parent=1 // pred_region
      %s29 = ssub.s32 16, 16
      %30 = vsyncadd [#allocation5], %s29
      %33 = dma.hbm_to_smem %s0, 16, [#allocation2], [#allocation5]
    $region5: #{tpu_custom_call.1} parent=1 // pred_fallthru
      _
    // Predicated region
    $region6: #{tpu_custom_call.1} parent=1 // pred_check
      _
    $region7: #{tpu_custom_call.1} parent=1 // pred_check_branch
      %35 = sbr.rel (0) target = $region9
    $region8: #{tpu_custom_call.1} parent=1 // pred_region
      %s37 = ssub.s32 256, 256
      %38 = vsyncadd [#allocation3], %s37
      %s39 = sshll.u32 [#allocation6], 4
      %s40 = int_to_ptr.vmem [resolvable:$true] %s39
      %45 = dma.hbm_to_vmem [thread:$0]  %s1, 256, %s40, [#allocation3], 128, 128, 8
    $region9: #{tpu_custom_call.1} parent=1 // pred_fallthru
      _
    // Predicated region
    $region10: #{tpu_custom_call.1} parent=1 // pred_check
      _
    $region11: #{tpu_custom_call.1} parent=1 // pred_check_branch
      %47 = sbr.rel (0) target = $region13
    $region12: #{tpu_custom_call.1} parent=1 // pred_region
      _
    $region13: #{tpu_custom_call.1} parent=1 // pred_fallthru
      _
    // Predicated region
    $region14: #{tpu_custom_call.1} parent=1 // pred_check
      _
    $region15: #{tpu_custom_call.1} parent=1 // pred_check_branch
      %49 = sbr.rel (0) target = $region17
    $region16: #{tpu_custom_call.1} parent=1 // pred_region
      _
    $region17: #{tpu_custom_call.1} parent=1 // pred_fallthru
      _
    // Predicated region
    $region18: #{tpu_custom_call.1} parent=1 // pred_check
      _
    $region19: #{tpu_custom_call.1} parent=1 // pred_check_branch
      %51 = sbr.rel (0) target = $region21
    $region20: #{tpu_custom_call.1} parent=1 // pred_region
      _
    $region21: #{tpu_custom_call.1} parent=1 // pred_fallthru
      _
    // Predicated region
    $region22: #{tpu_custom_call.1} parent=1 // pred_check
      _
    $region23: #{tpu_custom_call.1} parent=1 // pred_check_branch
      %53 = sbr.rel (0) target = $region25
    $region24: #{tpu_custom_call.1} parent=1 // pred_region
      _
    $region25: #{tpu_custom_call.1} parent=1 // pred_fallthru
      _
    // Predicated region
    $region26: #{tpu_custom_call.1} parent=1 // pred_check
      _
    $region27: #{tpu_custom_call.1} parent=1 // pred_check_branch
      %55 = sbr.rel (0) target = $region29
    $region28: #{tpu_custom_call.1} parent=1 // pred_region
      _
    $region29: #{tpu_custom_call.1} parent=1 // pred_fallthru
      _
    // Predicated region
    $region30: #{tpu_custom_call.1} parent=1 // pred_check
      _
    $region31: #{tpu_custom_call.1} parent=1 // pred_check_branch
      %57 = sbr.rel (0) target = $region33
    $region32: #{tpu_custom_call.1} parent=1 // pred_region
      _
    $region33: #{tpu_custom_call.1} parent=1 // pred_fallthru
      _
    // Predicated region
    $region34: #{tpu_custom_call.1} parent=1 // pred_check
      _
    $region35: #{tpu_custom_call.1} parent=1 // pred_check_branch
      %59 = sbr.rel (0) target = $region37
    $region36: #{tpu_custom_call.1} parent=1 // pred_region
      _
    $region37: #{tpu_custom_call.1} parent=1 // pred_fallthru
      _
    // Predicated region
    $region38: #{tpu_custom_call.1} parent=1 // pred_check
      _
    $region39: #{tpu_custom_call.1} parent=1 // pred_check_branch
      %61 = sbr.rel (0) target = $region41
    $region40: #{tpu_custom_call.1} parent=1 // pred_region
      _
    $region41: #{tpu_custom_call.1} parent=1 // pred_fallthru
      _
    // Predicated region
    $region42: #{tpu_custom_call.1} parent=1 // pred_check
      _
    $region43: #{tpu_custom_call.1} parent=1 // pred_check_branch
      %63 = sbr.rel (0) target = $region45
    $region44: #{tpu_custom_call.1} parent=1 // pred_region
      _
    $region45: #{tpu_custom_call.1} parent=1 // pred_fallthru
      _
    // Predicated region
    $region46: #{tpu_custom_call.1} parent=1 // pred_check
      _
    $region47: #{tpu_custom_call.1} parent=1 // pred_check_branch
      %65 = sbr.rel (0) target = $region49
    $region48: #{tpu_custom_call.1} parent=1 // pred_region
      _
    $region49: #{tpu_custom_call.1} parent=1 // pred_fallthru
      _
    // Predicated region
    $region50: #{tpu_custom_call.1} parent=1 // pred_check
      _
    $region51: #{tpu_custom_call.1} parent=1 // pred_check_branch
      %67 = sbr.rel (0) target = $region53
    $region52: #{tpu_custom_call.1} parent=1 // pred_region
      _
    $region53: #{tpu_custom_call.1} parent=1 // pred_fallthru
      _
    // Predicated region
    $region54: #{tpu_custom_call.1} parent=1 // pred_check
      _
    $region55: #{tpu_custom_call.1} parent=1 // pred_check_branch
      %69 = sbr.rel (0) target = $region57
    $region56: #{tpu_custom_call.1} parent=1 // pred_region
      _
    $region57: #{tpu_custom_call.1} parent=1 // pred_fallthru
      _
    // Predicated region
    $region58: #{tpu_custom_call.1} parent=1 // pred_check
      _
    $region59: #{tpu_custom_call.1} parent=1 // pred_check_branch
      %71 = sbr.rel (0) target = $region61
    $region60: #{tpu_custom_call.1} parent=1 // pred_region
      _
    $region61: #{tpu_custom_call.1} parent=1 // pred_fallthru
      _
    // Predicated region
    $region62: #{tpu_custom_call.1} parent=1 // pred_check
      _
    $region63: #{tpu_custom_call.1} parent=1 // pred_check_branch
      %73 = sbr.rel (0) target = $region65
    $region64: #{tpu_custom_call.1} parent=1 // pred_region
      _
    $region65: #{tpu_custom_call.1} parent=1 // pred_fallthru
      _
    // Predicated region
    $region66: #{tpu_custom_call.1} parent=1 // pred_check
      _
    $region67: #{tpu_custom_call.1} parent=1 // pred_check_branch
      %75 = sbr.rel (0) target = $region69
    $region68: #{tpu_custom_call.1} parent=1 // pred_region
      _
    $region69: #{tpu_custom_call.1} parent=1 // pred_fallthru
      _
    // Predicated region
    $region70: #{tpu_custom_call.1} parent=1 // pred_check
      _
    $region71: #{tpu_custom_call.1} parent=1 // pred_check_branch
      %77 = sbr.rel (0) target = $region73
    $region72: #{tpu_custom_call.1} parent=1 // pred_region
      _
    $region73: #{tpu_custom_call.1} parent=1 // pred_fallthru
      _
    // Predicated region
    $region74: #{tpu_custom_call.1} parent=1 // pred_check
      _
    $region75: #{tpu_custom_call.1} parent=1 // pred_check_branch
      %79 = sbr.rel (0) target = $region77
    $region76: #{tpu_custom_call.1} parent=1 // pred_region
      %80 = dma.done [#allocation5], 16
    $region77: #{tpu_custom_call.1} parent=1 // pred_fallthru
      _
    // Predicated region
    $region78: #{tpu_custom_call.1} parent=1 // pred_check
      _
    $region79: #{tpu_custom_call.1} parent=1 // pred_check_branch
      %82 = sbr.rel (0) target = $region81
    $region80: #{tpu_custom_call.1} parent=1 // pred_region
      %83 = dma.done [#allocation3], 256
    $region81: #{tpu_custom_call.1} parent=1 // pred_fallthru
      _
    %84 = sfence
    %v85 = vld [vmem:[#allocation6] sm:$0xff]
    %v86 = vld [vmem:[#allocation6 + $0x8] sm:$0xff]
    %v87 = vld [vmem:[%s2] sm:$0xff]
    %v88 = vld [vmem:[%s2 + $0x8] sm:$0xff]
    %v89 = vld [vmem:[%s2 + $0x10] sm:$0xff]
    %v90 = vld [vmem:[%s2 + $0x18] sm:$0xff]
    %v91 = vld [vmem:[%s3] sm:$0x1]
    %v93 = vlaneseq
    %v94 = vshrl.u32 %v93, 7
    %v95 = vsub.s32 0, %v94
    %v96 = vrot.slane %v91, %v95
    %vm98 = vcmask 261120
    %v100 = vsel %vm98, %v85, 0
    %v103 = vsel %vm98, %v86, 0
    %105 = vmatprep.subr.mxu0 0.0
    %106 = vmatpush1.msra.mxu0 %v87
    %107 = vmatprep.subr.mxu0 0.0
    %108 = vmatpush1.msra.mxu0 %v88
    %109 = vmatprep.subr.mxu0 0.0
    %110 = vmatpush1.msra.mxu0 %v89
    %111 = vmatprep.subr.mxu0 0.0
    %112 = vmatpush1.msra.mxu0 %v90
    %113 = vmatprep.subr.mxu0 0.0
    %114 = vmatpush1.msra.mxu0 0.0
    %115 = vmatprep.subr.mxu0 0.0
    %116 = vmatpush1.msra.mxu0 0.0
    %117 = vmatprep.subr.mxu0 0.0
    %118 = vmatpush1.msra.mxu0 0.0
    %119 = vmatprep.subr.mxu0 0.0
    %120 = vmatpush1.msra.mxu0 0.0
    %121 = vmatprep.subr.mxu0 0.0
    %122 = vmatpush1.msra.mxu0 0.0
    %123 = vmatprep.subr.mxu0 0.0
    %124 = vmatpush1.msra.mxu0 0.0
    %125 = vmatprep.subr.mxu0 0.0
    %126 = vmatpush1.msra.mxu0 0.0
    %127 = vmatprep.subr.mxu0 0.0
    %128 = vmatpush1.msra.mxu0 0.0
    %129 = vmatprep.subr.mxu0 0.0
    %130 = vmatpush1.msra.mxu0 0.0
    %131 = vmatprep.subr.mxu0 0.0
    %132 = vmatpush1.msra.mxu0 0.0
    %133 = vmatprep.subr.mxu0 0.0
    %134 = vmatpush1.msra.mxu0 0.0
    %135 = vmatprep.subr.mxu0 0.0
    %136 = vmatpush1.msra.mxu0 0.0
    %137 = vmatprep.subr.mxu0 0.0
    %138 = vmatpush1.msra.mxu0 0.0
    %139 = vmatprep.subr.mxu0 0.0
    %140 = vmatpush1.msra.mxu0 0.0
    %141 = vmatprep.subr.mxu0 0.0
    %142 = vmatpush1.msra.mxu0 0.0
    %143 = vmatprep.subr.mxu0 0.0
    %144 = vmatpush1.msra.mxu0 0.0
    %145 = vmatprep.subr.mxu0 0.0
    %146 = vmatpush1.msra.mxu0 0.0
    %147 = vmatprep.subr.mxu0 0.0
    %148 = vmatpush1.msra.mxu0 0.0
    %149 = vmatprep.subr.mxu0 0.0
    %150 = vmatpush1.msra.mxu0 0.0
    %151 = vmatprep.subr.mxu0 0.0
    %152 = vmatpush1.msra.mxu0 0.0
    %153 = vmatprep.subr.mxu0 0.0
    %154 = vmatpush1.msra.mxu0 0.0
    %155 = vmatprep.subr.mxu0 0.0
    %156 = vmatpush1.msra.mxu0 0.0
    %157 = vmatprep.subr.mxu0 0.0
    %158 = vmatpush1.msra.mxu0 0.0
    %159 = vmatprep.subr.mxu0 0.0
    %160 = vmatpush1.msra.mxu0 0.0
    %161 = vmatprep.subr.mxu0 0.0
    %162 = vmatpush1.msra.mxu0 0.0
    %163 = vmatprep.subr.mxu0 0.0
    %164 = vmatpush1.msra.mxu0 0.0
    %165 = vmatprep.subr.mxu0 0.0
    %166 = vmatpush1.msra.mxu0 0.0
    %167 = vmatprep.subr.mxu0 0.0
    %168 = vmatpush1.msra.mxu0 0.0
    %169 = vmatprep.mubr.f32.mxu0 0.0
    %170 = vmatmul.mubr.f32.gmra.mrb[0].mxu0 %v100
    %v171 = vpop.f32.mrb[0].mxu0
    %v172 = vadd.f32 %v96, %v171
    %v173 = vpop.f32.mrb[0].mxu0
    %174 = vmatprep.mubr.f32.mxu0 0.0
    %175 = vmatmul.mubr.f32.gmra.mrb[0].mxu0 %v103
    %v176 = vpop.f32.mrb[0].mxu0
    %v177 = vadd.f32 %v96, %v176
    %v178 = vpop.f32.mrb[0].mxu0
    %179 = vdwg.mxu0
    %v180 = vld [vmem:[%s4] sm:$0xff]
    %v181 = vld [vmem:[%s4 + $0x8] sm:$0xff]
    %v182 = vld [vmem:[%s4 + $0x10] sm:$0xff]
    %v183 = vld [vmem:[%s4 + $0x18] sm:$0xff]
    %v184 = vld [vmem:[%s5] sm:$0x1]
    %v186 = vlaneseq
    %v187 = vshrl.u32 %v186, 7
    %v188 = vsub.s32 0, %v187
    %v189 = vrot.slane %v184, %v188
    %191 = vmatprep.subr.mxu0 0.0
    %192 = vmatpush1.msra.mxu0 %v180
    %193 = vmatprep.subr.mxu0 0.0
    %194 = vmatpush1.msra.mxu0 %v181
    %195 = vmatprep.subr.mxu0 0.0
    %196 = vmatpush1.msra.mxu0 %v182
    %197 = vmatprep.subr.mxu0 0.0
    %198 = vmatpush1.msra.mxu0 %v183
    %199 = vmatprep.subr.mxu0 0.0
    %200 = vmatpush1.msra.mxu0 0.0
    %201 = vmatprep.subr.mxu0 0.0
    %202 = vmatpush1.msra.mxu0 0.0
    %203 = vmatprep.subr.mxu0 0.0
    %204 = vmatpush1.msra.mxu0 0.0
    %205 = vmatprep.subr.mxu0 0.0
    %206 = vmatpush1.msra.mxu0 0.0
    %207 = vmatprep.subr.mxu0 0.0
    %208 = vmatpush1.msra.mxu0 0.0
    %209 = vmatprep.subr.mxu0 0.0
    %210 = vmatpush1.msra.mxu0 0.0
    %211 = vmatprep.subr.mxu0 0.0
    %212 = vmatpush1.msra.mxu0 0.0
    %213 = vmatprep.subr.mxu0 0.0
    %214 = vmatpush1.msra.mxu0 0.0
    %215 = vmatprep.subr.mxu0 0.0
    %216 = vmatpush1.msra.mxu0 0.0
    %217 = vmatprep.subr.mxu0 0.0
    %218 = vmatpush1.msra.mxu0 0.0
    %219 = vmatprep.subr.mxu0 0.0
    %220 = vmatpush1.msra.mxu0 0.0
    %221 = vmatprep.subr.mxu0 0.0
    %222 = vmatpush1.msra.mxu0 0.0
    %223 = vmatprep.subr.mxu0 0.0
    %224 = vmatpush1.msra.mxu0 0.0
    %225 = vmatprep.subr.mxu0 0.0
    %226 = vmatpush1.msra.mxu0 0.0
    %227 = vmatprep.subr.mxu0 0.0
    %228 = vmatpush1.msra.mxu0 0.0
    %229 = vmatprep.subr.mxu0 0.0
    %230 = vmatpush1.msra.mxu0 0.0
    %231 = vmatprep.subr.mxu0 0.0
    %232 = vmatpush1.msra.mxu0 0.0
    %233 = vmatprep.subr.mxu0 0.0
    %234 = vmatpush1.msra.mxu0 0.0
    %235 = vmatprep.subr.mxu0 0.0
    %236 = vmatpush1.msra.mxu0 0.0
    %237 = vmatprep.subr.mxu0 0.0
    %238 = vmatpush1.msra.mxu0 0.0
    %239 = vmatprep.subr.mxu0 0.0
    %240 = vmatpush1.msra.mxu0 0.0
    %241 = vmatprep.subr.mxu0 0.0
    %242 = vmatpush1.msra.mxu0 0.0
    %243 = vmatprep.subr.mxu0 0.0
    %244 = vmatpush1.msra.mxu0 0.0
    %245 = vmatprep.subr.mxu0 0.0
    %246 = vmatpush1.msra.mxu0 0.0
    %247 = vmatprep.subr.mxu0 0.0
    %248 = vmatpush1.msra.mxu0 0.0
    %249 = vmatprep.subr.mxu0 0.0
    %250 = vmatpush1.msra.mxu0 0.0
    %251 = vmatprep.subr.mxu0 0.0
    %252 = vmatpush1.msra.mxu0 0.0
    %253 = vmatprep.subr.mxu0 0.0
    %254 = vmatpush1.msra.mxu0 0.0
    %255 = vmatprep.mubr.f32.mxu0 0.0
    %256 = vmatmul.mubr.f32.gmra.mrb[0].mxu0 %v100
    %v257 = vpop.f32.mrb[0].mxu0
    %v258 = vadd.f32 %v189, %v257
    %v259 = vpop.f32.mrb[0].mxu0
    %260 = vmatprep.mubr.f32.mxu0 0.0
    %261 = vmatmul.mubr.f32.gmra.mrb[0].mxu0 %v103
    %v262 = vpop.f32.mrb[0].mxu0
    %v263 = vadd.f32 %v189, %v262
    %v264 = vpop.f32.mrb[0].mxu0
    %265 = vdwg.mxu0
    %v266 = vld [vmem:[%s6] sm:$0xff]
    %v267 = vld [vmem:[%s6 + $0x8] sm:$0xff]
    %v268 = vld [vmem:[%s6 + $0x10] sm:$0xff]
    %v269 = vld [vmem:[%s6 + $0x18] sm:$0xff]
    %v270 = vld [vmem:[%s7] sm:$0x1]
    %v272 = vlaneseq
    %v273 = vshrl.u32 %v272, 7
    %v274 = vsub.s32 0, %v273
    %v275 = vrot.slane %v270, %v274
    %277 = vmatprep.subr.mxu0 0.0
    %278 = vmatpush1.msra.mxu0 %v266
    %279 = vmatprep.subr.mxu0 0.0
    %280 = vmatpush1.msra.mxu0 %v267
    %281 = vmatprep.subr.mxu0 0.0
    %282 = vmatpush1.msra.mxu0 %v268
    %283 = vmatprep.subr.mxu0 0.0
    %284 = vmatpush1.msra.mxu0 %v269
    %285 = vmatprep.subr.mxu0 0.0
    %286 = vmatpush1.msra.mxu0 0.0
    %287 = vmatprep.subr.mxu0 0.0
    %288 = vmatpush1.msra.mxu0 0.0
    %289 = vmatprep.subr.mxu0 0.0
    %290 = vmatpush1.msra.mxu0 0.0
    %291 = vmatprep.subr.mxu0 0.0
    %292 = vmatpush1.msra.mxu0 0.0
    %293 = vmatprep.subr.mxu0 0.0
    %294 = vmatpush1.msra.mxu0 0.0
    %295 = vmatprep.subr.mxu0 0.0
    %296 = vmatpush1.msra.mxu0 0.0
    %297 = vmatprep.subr.mxu0 0.0
    %298 = vmatpush1.msra.mxu0 0.0
    %299 = vmatprep.subr.mxu0 0.0
    %300 = vmatpush1.msra.mxu0 0.0
    %301 = vmatprep.subr.mxu0 0.0
    %302 = vmatpush1.msra.mxu0 0.0
    %303 = vmatprep.subr.mxu0 0.0
    %304 = vmatpush1.msra.mxu0 0.0
    %305 = vmatprep.subr.mxu0 0.0
    %306 = vmatpush1.msra.mxu0 0.0
    %307 = vmatprep.subr.mxu0 0.0
    %308 = vmatpush1.msra.mxu0 0.0
    %309 = vmatprep.subr.mxu0 0.0
    %310 = vmatpush1.msra.mxu0 0.0
    %311 = vmatprep.subr.mxu0 0.0
    %312 = vmatpush1.msra.mxu0 0.0
    %313 = vmatprep.subr.mxu0 0.0
    %314 = vmatpush1.msra.mxu0 0.0
    %315 = vmatprep.subr.mxu0 0.0
    %316 = vmatpush1.msra.mxu0 0.0
    %317 = vmatprep.subr.mxu0 0.0
    %318 = vmatpush1.msra.mxu0 0.0
    %319 = vmatprep.subr.mxu0 0.0
    %320 = vmatpush1.msra.mxu0 0.0
    %321 = vmatprep.subr.mxu0 0.0
    %322 = vmatpush1.msra.mxu0 0.0
    %323 = vmatprep.subr.mxu0 0.0
    %324 = vmatpush1.msra.mxu0 0.0
    %325 = vmatprep.subr.mxu0 0.0
    %326 = vmatpush1.msra.mxu0 0.0
    %327 = vmatprep.subr.mxu0 0.0
    %328 = vmatpush1.msra.mxu0 0.0
    %329 = vmatprep.subr.mxu0 0.0
    %330 = vmatpush1.msra.mxu0 0.0
    %331 = vmatprep.subr.mxu0 0.0
    %332 = vmatpush1.msra.mxu0 0.0
    %333 = vmatprep.subr.mxu0 0.0
    %334 = vmatpush1.msra.mxu0 0.0
    %335 = vmatprep.subr.mxu0 0.0
    %336 = vmatpush1.msra.mxu0 0.0
    %337 = vmatprep.subr.mxu0 0.0
    %338 = vmatpush1.msra.mxu0 0.0
    %339 = vmatprep.subr.mxu0 0.0
    %340 = vmatpush1.msra.mxu0 0.0
    %341 = vmatprep.mubr.f32.mxu0 0.0
    %342 = vmatmul.mubr.f32.gmra.mrb[0].mxu0 %v100
    %v343 = vpop.f32.mrb[0].mxu0
    %v344 = vadd.f32 %v275, %v343
    %v345 = vpop.f32.mrb[0].mxu0
    %346 = vmatprep.mubr.f32.mxu0 0.0
    %347 = vmatmul.mubr.f32.gmra.mrb[0].mxu0 %v103
    %v348 = vpop.f32.mrb[0].mxu0
    %v349 = vadd.f32 %v275, %v348
    %v350 = vpop.f32.mrb[0].mxu0
    %351 = vdwg.mxu0
    %v352 = vlaneseq
    %v353 = vand.u32 %v352, 127
    %v354 = vlaneseq
    %v355 = vshrl.u32 %v354, 7
    %vm356 = vcmp.eq.s32.totalorder %v355, 0
    %s357 = sld [smem:[#allocation2]]
    %v358 = vstv %s357
    %v359 = vsel %vm356, %v358, 0
    %vm360 = vcmp.eq.s32.totalorder %v355, 1
    %s361 = sld [smem:[#allocation2 + $0x1]]
    %v362 = vstv %s361
    %v363 = vsel %vm360, %v362, %v359
    %vm364 = vcmp.lt.s32.totalorder %v353, %v363
    %v365 = vsel %vm364, 1, 0
    %v366 = vcvt.s32.f32 %v365
    %v369 = vunpack.c.l.s4 1966171168
    %v370 = vunpack.c.0.s8 %v369
    %v371 = vlaneseq
    %v372 = vshrl.u32 %v371, 7
    %v373 = vsub.s32 %v370, %v372
    %v374 = vrot.slane %v366, %v373
    %v375 = vcombine.high %v374, %v374
    %v377 = vunpack.c.l.s4 1966171168
    %v378 = vunpack.c.0.s8 %v377
    %v379 = vlaneseq
    %v380 = vshrl.u32 %v379, 7
    %v381 = vsub.s32 %v378, %v380
    %v382 = vrot.slane %v374, %v381
    %v384 = vunpack.c.l.s4 1966171168
    %v385 = vunpack.c.0.s8 %v384
    %v386 = vlaneseq
    %v387 = vshrl.u32 %v386, 7
    %v388 = vsub.s32 %v385, %v387
    %v389 = vrot.slane %v375, %v388
    %v390 = vld [vmem:[%s8] sm:$0xff]
    %v391 = vld [vmem:[%s8 + $0x8] sm:$0xff]
    %v392 = vld [vmem:[%s8 + $0x10] sm:$0xff]
    %v393 = vld [vmem:[%s8 + $0x18] sm:$0xff]
    %vm394 = vcmask 64512
    %v396 = vsel %vm394, %v172, 0
    %v399 = vsel %vm394, %v258, 0
    %401 = vmatprep.subr.mxu0 0.0
    %402 = vmatpush1.xpose.msra.mxu0 %v399
    %403 = vmatprep.subr.mxu0 0.0
    %404 = vmatpush1.xpose.msra.mxu0 0.0
    %405 = vmatprep.subr.mxu0 0.0
    %406 = vmatpush1.xpose.msra.mxu0 0.0
    %407 = vmatprep.subr.mxu0 0.0
    %408 = vmatpush1.xpose.msra.mxu0 0.0
    %409 = vmatprep.subr.mxu0 0.0
    %410 = vmatpush1.xpose.msra.mxu0 0.0
    %411 = vmatprep.subr.mxu0 0.0
    %412 = vmatpush1.xpose.msra.mxu0 0.0
    %413 = vmatprep.subr.mxu0 0.0
    %414 = vmatpush1.xpose.msra.mxu0 0.0
    %415 = vmatprep.subr.mxu0 0.0
    %416 = vmatpush1.xpose.msra.mxu0 0.0
    %417 = vmatprep.subr.mxu0 0.0
    %418 = vmatpush1.xpose.msra.mxu0 0.0
    %419 = vmatprep.subr.mxu0 0.0
    %420 = vmatpush1.xpose.msra.mxu0 0.0
    %421 = vmatprep.subr.mxu0 0.0
    %422 = vmatpush1.xpose.msra.mxu0 0.0
    %423 = vmatprep.subr.mxu0 0.0
    %424 = vmatpush1.xpose.msra.mxu0 0.0
    %425 = vmatprep.subr.mxu0 0.0
    %426 = vmatpush1.xpose.msra.mxu0 0.0
    %427 = vmatprep.subr.mxu0 0.0
    %428 = vmatpush1.xpose.msra.mxu0 0.0
    %429 = vmatprep.subr.mxu0 0.0
    %430 = vmatpush1.xpose.msra.mxu0 0.0
    %431 = vmatprep.subr.mxu0 0.0
    %432 = vmatpush1.xpose.msra.mxu0 0.0
    %433 = vmatprep.subr.mxu0 0.0
    %434 = vmatpush1.xpose.msra.mxu0 0.0
    %435 = vmatprep.subr.mxu0 0.0
    %436 = vmatpush1.xpose.msra.mxu0 0.0
    %437 = vmatprep.subr.mxu0 0.0
    %438 = vmatpush1.xpose.msra.mxu0 0.0
    %439 = vmatprep.subr.mxu0 0.0
    %440 = vmatpush1.xpose.msra.mxu0 0.0
    %441 = vmatprep.subr.mxu0 0.0
    %442 = vmatpush1.xpose.msra.mxu0 0.0
    %443 = vmatprep.subr.mxu0 0.0
    %444 = vmatpush1.xpose.msra.mxu0 0.0
    %445 = vmatprep.subr.mxu0 0.0
    %446 = vmatpush1.xpose.msra.mxu0 0.0
    %447 = vmatprep.subr.mxu0 0.0
    %448 = vmatpush1.xpose.msra.mxu0 0.0
    %449 = vmatprep.subr.mxu0 0.0
    %450 = vmatpush1.xpose.msra.mxu0 0.0
    %451 = vmatprep.subr.mxu0 0.0
    %452 = vmatpush1.xpose.msra.mxu0 0.0
    %453 = vmatprep.subr.mxu0 0.0
    %454 = vmatpush1.xpose.msra.mxu0 0.0
    %455 = vmatprep.subr.mxu0 0.0
    %456 = vmatpush1.xpose.msra.mxu0 0.0
    %457 = vmatprep.subr.mxu0 0.0
    %458 = vmatpush1.xpose.msra.mxu0 0.0
    %459 = vmatprep.subr.mxu0 0.0
    %460 = vmatpush1.xpose.msra.mxu0 0.0
    %461 = vmatprep.subr.mxu0 0.0
    %462 = vmatpush1.xpose.msra.mxu0 0.0
    %463 = vmatprep.subr.mxu0 0.0
    %464 = vmatpush1.xpose.msra.mxu0 0.0
    %465 = vmatprep.mubr.f32.mxu0 0.0
    %466 = vmatmul.mubr.f32.gmra.mrb[0].mxu0 %v396
    %v467 = vpop.f32.mrb[0].mxu0
    %v468 = vadd.f32 0.0, %v467
    %v469 = vpop.f32.mrb[0].mxu0
    %470 = vdwg.mxu0
    %v472 = vsel %vm394, %v177, 0
    %v475 = vsel %vm394, %v263, 0
    %477 = vmatprep.subr.mxu0 0.0
    %478 = vmatpush1.xpose.msra.mxu0 %v475
    %479 = vmatprep.subr.mxu0 0.0
    %480 = vmatpush1.xpose.msra.mxu0 0.0
    %481 = vmatprep.subr.mxu0 0.0
    %482 = vmatpush1.xpose.msra.mxu0 0.0
    %483 = vmatprep.subr.mxu0 0.0
    %484 = vmatpush1.xpose.msra.mxu0 0.0
    %485 = vmatprep.subr.mxu0 0.0
    %486 = vmatpush1.xpose.msra.mxu0 0.0
    %487 = vmatprep.subr.mxu0 0.0
    %488 = vmatpush1.xpose.msra.mxu0 0.0
    %489 = vmatprep.subr.mxu0 0.0
    %490 = vmatpush1.xpose.msra.mxu0 0.0
    %491 = vmatprep.subr.mxu0 0.0
    %492 = vmatpush1.xpose.msra.mxu0 0.0
    %493 = vmatprep.subr.mxu0 0.0
    %494 = vmatpush1.xpose.msra.mxu0 0.0
    %495 = vmatprep.subr.mxu0 0.0
    %496 = vmatpush1.xpose.msra.mxu0 0.0
    %497 = vmatprep.subr.mxu0 0.0
    %498 = vmatpush1.xpose.msra.mxu0 0.0
    %499 = vmatprep.subr.mxu0 0.0
    %500 = vmatpush1.xpose.msra.mxu0 0.0
    %501 = vmatprep.subr.mxu0 0.0
    %502 = vmatpush1.xpose.msra.mxu0 0.0
    %503 = vmatprep.subr.mxu0 0.0
    %504 = vmatpush1.xpose.msra.mxu0 0.0
    %505 = vmatprep.subr.mxu0 0.0
    %506 = vmatpush1.xpose.msra.mxu0 0.0
    %507 = vmatprep.subr.mxu0 0.0
    %508 = vmatpush1.xpose.msra.mxu0 0.0
    %509 = vmatprep.subr.mxu0 0.0
    %510 = vmatpush1.xpose.msra.mxu0 0.0
    %511 = vmatprep.subr.mxu0 0.0
    %512 = vmatpush1.xpose.msra.mxu0 0.0
    %513 = vmatprep.subr.mxu0 0.0
    %514 = vmatpush1.xpose.msra.mxu0 0.0
    %515 = vmatprep.subr.mxu0 0.0
    %516 = vmatpush1.xpose.msra.mxu0 0.0
    %517 = vmatprep.subr.mxu0 0.0
    %518 = vmatpush1.xpose.msra.mxu0 0.0
    %519 = vmatprep.subr.mxu0 0.0
    %520 = vmatpush1.xpose.msra.mxu0 0.0
    %521 = vmatprep.subr.mxu0 0.0
    %522 = vmatpush1.xpose.msra.mxu0 0.0
    %523 = vmatprep.subr.mxu0 0.0
    %524 = vmatpush1.xpose.msra.mxu0 0.0
    %525 = vmatprep.subr.mxu0 0.0
    %526 = vmatpush1.xpose.msra.mxu0 0.0
    %527 = vmatprep.subr.mxu0 0.0
    %528 = vmatpush1.xpose.msra.mxu0 0.0
    %529 = vmatprep.subr.mxu0 0.0
    %530 = vmatpush1.xpose.msra.mxu0 0.0
    %531 = vmatprep.subr.mxu0 0.0
    %532 = vmatpush1.xpose.msra.mxu0 0.0
    %533 = vmatprep.subr.mxu0 0.0
    %534 = vmatpush1.xpose.msra.mxu0 0.0
    %535 = vmatprep.subr.mxu0 0.0
    %536 = vmatpush1.xpose.msra.mxu0 0.0
    %537 = vmatprep.subr.mxu0 0.0
    %538 = vmatpush1.xpose.msra.mxu0 0.0
    %539 = vmatprep.subr.mxu0 0.0
    %540 = vmatpush1.xpose.msra.mxu0 0.0
    %541 = vmatprep.mubr.f32.mxu0 0.0
    %542 = vmatmul.mubr.f32.gmra.mrb[0].mxu0 %v472
    %v543 = vpop.f32.mrb[0].mxu0
    %v544 = vadd.f32 0.0, %v543
    %v545 = vpop.f32.mrb[0].mxu0
    %546 = vdwg.mxu0
    %v547 = vmul.f32 %v468, 0.35355338
    %v548 = vmul.f32 %v544, 0.35355338
    %v549 = vlaneseq
    %v550 = vshrl.u32 %v549, 7
    %v551 = vsub.s32 0, %v550
    %v552 = vrot.slane %v382, %v551
    %v553 = vlaneseq
    %v554 = vshrl.u32 %v553, 7
    %v555 = vsub.s32 0, %v554
    %v556 = vrot.slane %v389, %v555
    %v559 = vmul.f32 %v547, %v552
    %v560 = vmul.f32 %v548, %v556
    %v561 = vsel %vm394, %v559, -inf
    %v562 = vsel %vm394, %v560, -inf
    %v563 = vmax.f32 %v561, %v562
    %v564 = vsub.f32 %v559, %v563
    %v565 = vsub.f32 %v560, %v563
    %v566 = vmul.f32 %v564, 1.442695
    %v567 = vpow.pop %v566
    %v568 = vmul.f32 %v565, 1.442695
    %v569 = vpow.pop %v568
    %v570 = vsel %vm394, %v567, 0.0
    %v571 = vsel %vm394, %v569, 0.0
    %v572 = vadd.f32 %v570, %v571
    %v573 = vrcp.pop %v572
    %v574 = vmul.f32 %v567, %v573
    %v575 = vmul.f32 %v569, %v573
    %v577 = vsel %vm394, %v574, 0
    %579 = vmatprep.subr.mxu0 0.0
    %580 = vmatpush1.msra.mxu0 %v344
    %581 = vmatprep.subr.mxu0 0.0
    %582 = vmatpush1.msra.mxu0 0.0
    %583 = vmatprep.subr.mxu0 0.0
    %584 = vmatpush1.msra.mxu0 0.0
    %585 = vmatprep.subr.mxu0 0.0
    %586 = vmatpush1.msra.mxu0 0.0
    %587 = vmatprep.subr.mxu0 0.0
    %588 = vmatpush1.msra.mxu0 0.0
    %589 = vmatprep.subr.mxu0 0.0
    %590 = vmatpush1.msra.mxu0 0.0
    %591 = vmatprep.subr.mxu0 0.0
    %592 = vmatpush1.msra.mxu0 0.0
    %593 = vmatprep.subr.mxu0 0.0
    %594 = vmatpush1.msra.mxu0 0.0
    %595 = vmatprep.subr.mxu0 0.0
    %596 = vmatpush1.msra.mxu0 0.0
    %597 = vmatprep.subr.mxu0 0.0
    %598 = vmatpush1.msra.mxu0 0.0
    %599 = vmatprep.subr.mxu0 0.0
    %600 = vmatpush1.msra.mxu0 0.0
    %601 = vmatprep.subr.mxu0 0.0
    %602 = vmatpush1.msra.mxu0 0.0
    %603 = vmatprep.subr.mxu0 0.0
    %604 = vmatpush1.msra.mxu0 0.0
    %605 = vmatprep.subr.mxu0 0.0
    %606 = vmatpush1.msra.mxu0 0.0
    %607 = vmatprep.subr.mxu0 0.0
    %608 = vmatpush1.msra.mxu0 0.0
    %609 = vmatprep.subr.mxu0 0.0
    %610 = vmatpush1.msra.mxu0 0.0
    %611 = vmatprep.subr.mxu0 0.0
    %612 = vmatpush1.msra.mxu0 0.0
    %613 = vmatprep.subr.mxu0 0.0
    %614 = vmatpush1.msra.mxu0 0.0
    %615 = vmatprep.subr.mxu0 0.0
    %616 = vmatpush1.msra.mxu0 0.0
    %617 = vmatprep.subr.mxu0 0.0
    %618 = vmatpush1.msra.mxu0 0.0
    %619 = vmatprep.subr.mxu0 0.0
    %620 = vmatpush1.msra.mxu0 0.0
    %621 = vmatprep.subr.mxu0 0.0
    %622 = vmatpush1.msra.mxu0 0.0
    %623 = vmatprep.subr.mxu0 0.0
    %624 = vmatpush1.msra.mxu0 0.0
    %625 = vmatprep.subr.mxu0 0.0
    %626 = vmatpush1.msra.mxu0 0.0
    %627 = vmatprep.subr.mxu0 0.0
    %628 = vmatpush1.msra.mxu0 0.0
    %629 = vmatprep.subr.mxu0 0.0
    %630 = vmatpush1.msra.mxu0 0.0
    %631 = vmatprep.subr.mxu0 0.0
    %632 = vmatpush1.msra.mxu0 0.0
    %633 = vmatprep.subr.mxu0 0.0
    %634 = vmatpush1.msra.mxu0 0.0
    %635 = vmatprep.subr.mxu0 0.0
    %636 = vmatpush1.msra.mxu0 0.0
    %637 = vmatprep.subr.mxu0 0.0
    %638 = vmatpush1.msra.mxu0 0.0
    %639 = vmatprep.subr.mxu0 0.0
    %640 = vmatpush1.msra.mxu0 0.0
    %641 = vmatprep.subr.mxu0 0.0
    %642 = vmatpush1.msra.mxu0 0.0
    %643 = vmatprep.mubr.f32.mxu0 0.0
    %644 = vmatmul.mubr.f32.gmra.mrb[0].mxu0 %v577
    %v645 = vpop.f32.mrb[0].mxu0
    %v646 = vadd.f32 0.0, %v645
    %v647 = vpop.f32.mrb[0].mxu0
    %648 = vdwg.mxu0
    %v650 = vsel %vm394, %v575, 0
    %652 = vmatprep.subr.mxu0 0.0
    %653 = vmatpush1.msra.mxu0 %v349
    %654 = vmatprep.subr.mxu0 0.0
    %655 = vmatpush1.msra.mxu0 0.0
    %656 = vmatprep.subr.mxu0 0.0
    %657 = vmatpush1.msra.mxu0 0.0
    %658 = vmatprep.subr.mxu0 0.0
    %659 = vmatpush1.msra.mxu0 0.0
    %660 = vmatprep.subr.mxu0 0.0
    %661 = vmatpush1.msra.mxu0 0.0
    %662 = vmatprep.subr.mxu0 0.0
    %663 = vmatpush1.msra.mxu0 0.0
    %664 = vmatprep.subr.mxu0 0.0
    %665 = vmatpush1.msra.mxu0 0.0
    %666 = vmatprep.subr.mxu0 0.0
    %667 = vmatpush1.msra.mxu0 0.0
    %668 = vmatprep.subr.mxu0 0.0
    %669 = vmatpush1.msra.mxu0 0.0
    %670 = vmatprep.subr.mxu0 0.0
    %671 = vmatpush1.msra.mxu0 0.0
    %672 = vmatprep.subr.mxu0 0.0
    %673 = vmatpush1.msra.mxu0 0.0
    %674 = vmatprep.subr.mxu0 0.0
    %675 = vmatpush1.msra.mxu0 0.0
    %676 = vmatprep.subr.mxu0 0.0
    %677 = vmatpush1.msra.mxu0 0.0
    %678 = vmatprep.subr.mxu0 0.0
    %679 = vmatpush1.msra.mxu0 0.0
    %680 = vmatprep.subr.mxu0 0.0
    %681 = vmatpush1.msra.mxu0 0.0
    %682 = vmatprep.subr.mxu0 0.0
    %683 = vmatpush1.msra.mxu0 0.0
    %684 = vmatprep.subr.mxu0 0.0
    %685 = vmatpush1.msra.mxu0 0.0
    %686 = vmatprep.subr.mxu0 0.0
    %687 = vmatpush1.msra.mxu0 0.0
    %688 = vmatprep.subr.mxu0 0.0
    %689 = vmatpush1.msra.mxu0 0.0
    %690 = vmatprep.subr.mxu0 0.0
    %691 = vmatpush1.msra.mxu0 0.0
    %692 = vmatprep.subr.mxu0 0.0
    %693 = vmatpush1.msra.mxu0 0.0
    %694 = vmatprep.subr.mxu0 0.0
    %695 = vmatpush1.msra.mxu0 0.0
    %696 = vmatprep.subr.mxu0 0.0
    %697 = vmatpush1.msra.mxu0 0.0
    %698 = vmatprep.subr.mxu0 0.0
    %699 = vmatpush1.msra.mxu0 0.0
    %700 = vmatprep.subr.mxu0 0.0
    %701 = vmatpush1.msra.mxu0 0.0
    %702 = vmatprep.subr.mxu0 0.0
    %703 = vmatpush1.msra.mxu0 0.0
    %704 = vmatprep.subr.mxu0 0.0
    %705 = vmatpush1.msra.mxu0 0.0
    %706 = vmatprep.subr.mxu0 0.0
    %707 = vmatpush1.msra.mxu0 0.0
    %708 = vmatprep.subr.mxu0 0.0
    %709 = vmatpush1.msra.mxu0 0.0
    %710 = vmatprep.subr.mxu0 0.0
    %711 = vmatpush1.msra.mxu0 0.0
    %712 = vmatprep.subr.mxu0 0.0
    %713 = vmatpush1.msra.mxu0 0.0
    %714 = vmatprep.subr.mxu0 0.0
    %715 = vmatpush1.msra.mxu0 0.0
    %716 = vmatprep.mubr.f32.mxu0 0.0
    %717 = vmatmul.mubr.f32.gmra.mrb[0].mxu0 %v650
    %v718 = vpop.f32.mrb[0].mxu0
    %v719 = vadd.f32 0.0, %v718
    %v720 = vpop.f32.mrb[0].mxu0
    %721 = vdwg.mxu0
    %722 = vrot.lane.b32.xlu0 %v172, 120
    %v723 = vpop.permute.xlu0 %722
    %724 = vrot.lane.b32.xlu0 %v258, 120
    %v725 = vpop.permute.xlu0 %724
    %v726 = vsel %vm394, %v723, 0
    %v728 = vsel %vm394, %v725, 0
    %730 = vmatprep.subr.mxu0 0.0
    %731 = vmatpush1.xpose.msra.mxu0 %v728
    %732 = vmatprep.subr.mxu0 0.0
    %733 = vmatpush1.xpose.msra.mxu0 0.0
    %734 = vmatprep.subr.mxu0 0.0
    %735 = vmatpush1.xpose.msra.mxu0 0.0
    %736 = vmatprep.subr.mxu0 0.0
    %737 = vmatpush1.xpose.msra.mxu0 0.0
    %738 = vmatprep.subr.mxu0 0.0
    %739 = vmatpush1.xpose.msra.mxu0 0.0
    %740 = vmatprep.subr.mxu0 0.0
    %741 = vmatpush1.xpose.msra.mxu0 0.0
    %742 = vmatprep.subr.mxu0 0.0
    %743 = vmatpush1.xpose.msra.mxu0 0.0
    %744 = vmatprep.subr.mxu0 0.0
    %745 = vmatpush1.xpose.msra.mxu0 0.0
    %746 = vmatprep.subr.mxu0 0.0
    %747 = vmatpush1.xpose.msra.mxu0 0.0
    %748 = vmatprep.subr.mxu0 0.0
    %749 = vmatpush1.xpose.msra.mxu0 0.0
    %750 = vmatprep.subr.mxu0 0.0
    %751 = vmatpush1.xpose.msra.mxu0 0.0
    %752 = vmatprep.subr.mxu0 0.0
    %753 = vmatpush1.xpose.msra.mxu0 0.0
    %754 = vmatprep.subr.mxu0 0.0
    %755 = vmatpush1.xpose.msra.mxu0 0.0
    %756 = vmatprep.subr.mxu0 0.0
    %757 = vmatpush1.xpose.msra.mxu0 0.0
    %758 = vmatprep.subr.mxu0 0.0
    %759 = vmatpush1.xpose.msra.mxu0 0.0
    %760 = vmatprep.subr.mxu0 0.0
    %761 = vmatpush1.xpose.msra.mxu0 0.0
    %762 = vmatprep.subr.mxu0 0.0
    %763 = vmatpush1.xpose.msra.mxu0 0.0
    %764 = vmatprep.subr.mxu0 0.0
    %765 = vmatpush1.xpose.msra.mxu0 0.0
    %766 = vmatprep.subr.mxu0 0.0
    %767 = vmatpush1.xpose.msra.mxu0 0.0
    %768 = vmatprep.subr.mxu0 0.0
    %769 = vmatpush1.xpose.msra.mxu0 0.0
    %770 = vmatprep.subr.mxu0 0.0
    %771 = vmatpush1.xpose.msra.mxu0 0.0
    %772 = vmatprep.subr.mxu0 0.0
    %773 = vmatpush1.xpose.msra.mxu0 0.0
    %774 = vmatprep.subr.mxu0 0.0
    %775 = vmatpush1.xpose.msra.mxu0 0.0
    %776 = vmatprep.subr.mxu0 0.0
    %777 = vmatpush1.xpose.msra.mxu0 0.0
    %778 = vmatprep.subr.mxu0 0.0
    %779 = vmatpush1.xpose.msra.mxu0 0.0
    %780 = vmatprep.subr.mxu0 0.0
    %781 = vmatpush1.xpose.msra.mxu0 0.0
    %782 = vmatprep.subr.mxu0 0.0
    %783 = vmatpush1.xpose.msra.mxu0 0.0
    %784 = vmatprep.subr.mxu0 0.0
    %785 = vmatpush1.xpose.msra.mxu0 0.0
    %786 = vmatprep.subr.mxu0 0.0
    %787 = vmatpush1.xpose.msra.mxu0 0.0
    %788 = vmatprep.subr.mxu0 0.0
    %789 = vmatpush1.xpose.msra.mxu0 0.0
    %790 = vmatprep.subr.mxu0 0.0
    %791 = vmatpush1.xpose.msra.mxu0 0.0
    %792 = vmatprep.subr.mxu0 0.0
    %793 = vmatpush1.xpose.msra.mxu0 0.0
    %794 = vmatprep.mubr.f32.mxu0 0.0
    %795 = vmatmul.mubr.f32.gmra.mrb[0].mxu0 %v726
    %v796 = vpop.f32.mrb[0].mxu0
    %v797 = vadd.f32 0.0, %v796
    %v798 = vpop.f32.mrb[0].mxu0
    %799 = vdwg.mxu0
    %800 = vrot.lane.b32.xlu0 %v177, 120
    %v801 = vpop.permute.xlu0 %800
    %802 = vrot.lane.b32.xlu0 %v263, 120
    %v803 = vpop.permute.xlu0 %802
    %v804 = vsel %vm394, %v801, 0
    %v806 = vsel %vm394, %v803, 0
    %808 = vmatprep.subr.mxu0 0.0
    %809 = vmatpush1.xpose.msra.mxu0 %v806
    %810 = vmatprep.subr.mxu0 0.0
    %811 = vmatpush1.xpose.msra.mxu0 0.0
    %812 = vmatprep.subr.mxu0 0.0
    %813 = vmatpush1.xpose.msra.mxu0 0.0
    %814 = vmatprep.subr.mxu0 0.0
    %815 = vmatpush1.xpose.msra.mxu0 0.0
    %816 = vmatprep.subr.mxu0 0.0
    %817 = vmatpush1.xpose.msra.mxu0 0.0
    %818 = vmatprep.subr.mxu0 0.0
    %819 = vmatpush1.xpose.msra.mxu0 0.0
    %820 = vmatprep.subr.mxu0 0.0
    %821 = vmatpush1.xpose.msra.mxu0 0.0
    %822 = vmatprep.subr.mxu0 0.0
    %823 = vmatpush1.xpose.msra.mxu0 0.0
    %824 = vmatprep.subr.mxu0 0.0
    %825 = vmatpush1.xpose.msra.mxu0 0.0
    %826 = vmatprep.subr.mxu0 0.0
    %827 = vmatpush1.xpose.msra.mxu0 0.0
    %828 = vmatprep.subr.mxu0 0.0
    %829 = vmatpush1.xpose.msra.mxu0 0.0
    %830 = vmatprep.subr.mxu0 0.0
    %831 = vmatpush1.xpose.msra.mxu0 0.0
    %832 = vmatprep.subr.mxu0 0.0
    %833 = vmatpush1.xpose.msra.mxu0 0.0
    %834 = vmatprep.subr.mxu0 0.0
    %835 = vmatpush1.xpose.msra.mxu0 0.0
    %836 = vmatprep.subr.mxu0 0.0
    %837 = vmatpush1.xpose.msra.mxu0 0.0
    %838 = vmatprep.subr.mxu0 0.0
    %839 = vmatpush1.xpose.msra.mxu0 0.0
    %840 = vmatprep.subr.mxu0 0.0
    %841 = vmatpush1.xpose.msra.mxu0 0.0
    %842 = vmatprep.subr.mxu0 0.0
    %843 = vmatpush1.xpose.msra.mxu0 0.0
    %844 = vmatprep.subr.mxu0 0.0
    %845 = vmatpush1.xpose.msra.mxu0 0.0
    %846 = vmatprep.subr.mxu0 0.0
    %847 = vmatpush1.xpose.msra.mxu0 0.0
    %848 = vmatprep.subr.mxu0 0.0
    %849 = vmatpush1.xpose.msra.mxu0 0.0
    %850 = vmatprep.subr.mxu0 0.0
    %851 = vmatpush1.xpose.msra.mxu0 0.0
    %852 = vmatprep.subr.mxu0 0.0
    %853 = vmatpush1.xpose.msra.mxu0 0.0
    %854 = vmatprep.subr.mxu0 0.0
    %855 = vmatpush1.xpose.msra.mxu0 0.0
    %856 = vmatprep.subr.mxu0 0.0
    %857 = vmatpush1.xpose.msra.mxu0 0.0
    %858 = vmatprep.subr.mxu0 0.0
    %859 = vmatpush1.xpose.msra.mxu0 0.0
    %860 = vmatprep.subr.mxu0 0.0
    %861 = vmatpush1.xpose.msra.mxu0 0.0
    %862 = vmatprep.subr.mxu0 0.0
    %863 = vmatpush1.xpose.msra.mxu0 0.0
    %864 = vmatprep.subr.mxu0 0.0
    %865 = vmatpush1.xpose.msra.mxu0 0.0
    %866 = vmatprep.subr.mxu0 0.0
    %867 = vmatpush1.xpose.msra.mxu0 0.0
    %868 = vmatprep.subr.mxu0 0.0
    %869 = vmatpush1.xpose.msra.mxu0 0.0
    %870 = vmatprep.subr.mxu0 0.0
    %871 = vmatpush1.xpose.msra.mxu0 0.0
    %872 = vmatprep.mubr.f32.mxu0 0.0
    %873 = vmatmul.mubr.f32.gmra.mrb[0].mxu0 %v804
    %v874 = vpop.f32.mrb[0].mxu0
    %v875 = vadd.f32 0.0, %v874
    %v876 = vpop.f32.mrb[0].mxu0
    %877 = vdwg.mxu0
    %v878 = vmul.f32 %v797, 0.35355338
    %v879 = vmul.f32 %v875, 0.35355338
    %v880 = vmul.f32 %v878, %v552
    %v881 = vmul.f32 %v879, %v556
    %v882 = vsel %vm394, %v880, -inf
    %v883 = vsel %vm394, %v881, -inf
    %v884 = vmax.f32 %v882, %v883
    %v885 = vsub.f32 %v880, %v884
    %v886 = vsub.f32 %v881, %v884
    %v887 = vmul.f32 %v885, 1.442695
    %v888 = vpow.pop %v887
    %v889 = vmul.f32 %v886, 1.442695
    %v890 = vpow.pop %v889
    %v891 = vsel %vm394, %v888, 0.0
    %v892 = vsel %vm394, %v890, 0.0
    %v893 = vadd.f32 %v891, %v892
    %v894 = vrcp.pop %v893
    %v895 = vmul.f32 %v888, %v894
    %v896 = vmul.f32 %v890, %v894
    %898 = vrot.lane.b32.xlu0 %v344, 120
    %v899 = vpop.permute.xlu0 %898
    %v902 = vsel %vm394, %v895, 0
    %904 = vmatprep.subr.mxu0 0.0
    %905 = vmatpush1.msra.mxu0 %v899
    %906 = vmatprep.subr.mxu0 0.0
    %907 = vmatpush1.msra.mxu0 0.0
    %908 = vmatprep.subr.mxu0 0.0
    %909 = vmatpush1.msra.mxu0 0.0
    %910 = vmatprep.subr.mxu0 0.0
    %911 = vmatpush1.msra.mxu0 0.0
    %912 = vmatprep.subr.mxu0 0.0
    %913 = vmatpush1.msra.mxu0 0.0
    %914 = vmatprep.subr.mxu0 0.0
    %915 = vmatpush1.msra.mxu0 0.0
    %916 = vmatprep.subr.mxu0 0.0
    %917 = vmatpush1.msra.mxu0 0.0
    %918 = vmatprep.subr.mxu0 0.0
    %919 = vmatpush1.msra.mxu0 0.0
    %920 = vmatprep.subr.mxu0 0.0
    %921 = vmatpush1.msra.mxu0 0.0
    %922 = vmatprep.subr.mxu0 0.0
    %923 = vmatpush1.msra.mxu0 0.0
    %924 = vmatprep.subr.mxu0 0.0
    %925 = vmatpush1.msra.mxu0 0.0
    %926 = vmatprep.subr.mxu0 0.0
    %927 = vmatpush1.msra.mxu0 0.0
    %928 = vmatprep.subr.mxu0 0.0
    %929 = vmatpush1.msra.mxu0 0.0
    %930 = vmatprep.subr.mxu0 0.0
    %931 = vmatpush1.msra.mxu0 0.0
    %932 = vmatprep.subr.mxu0 0.0
    %933 = vmatpush1.msra.mxu0 0.0
    %934 = vmatprep.subr.mxu0 0.0
    %935 = vmatpush1.msra.mxu0 0.0
    %936 = vmatprep.subr.mxu0 0.0
    %937 = vmatpush1.msra.mxu0 0.0
    %938 = vmatprep.subr.mxu0 0.0
    %939 = vmatpush1.msra.mxu0 0.0
    %940 = vmatprep.subr.mxu0 0.0
    %941 = vmatpush1.msra.mxu0 0.0
    %942 = vmatprep.subr.mxu0 0.0
    %943 = vmatpush1.msra.mxu0 0.0
    %944 = vmatprep.subr.mxu0 0.0
    %945 = vmatpush1.msra.mxu0 0.0
    %946 = vmatprep.subr.mxu0 0.0
    %947 = vmatpush1.msra.mxu0 0.0
    %948 = vmatprep.subr.mxu0 0.0
    %949 = vmatpush1.msra.mxu0 0.0
    %950 = vmatprep.subr.mxu0 0.0
    %951 = vmatpush1.msra.mxu0 0.0
    %952 = vmatprep.subr.mxu0 0.0
    %953 = vmatpush1.msra.mxu0 0.0
    %954 = vmatprep.subr.mxu0 0.0
    %955 = vmatpush1.msra.mxu0 0.0
    %956 = vmatprep.subr.mxu0 0.0
    %957 = vmatpush1.msra.mxu0 0.0
    %958 = vmatprep.subr.mxu0 0.0
    %959 = vmatpush1.msra.mxu0 0.0
    %960 = vmatprep.subr.mxu0 0.0
    %961 = vmatpush1.msra.mxu0 0.0
    %962 = vmatprep.subr.mxu0 0.0
    %963 = vmatpush1.msra.mxu0 0.0
    %964 = vmatprep.subr.mxu0 0.0
    %965 = vmatpush1.msra.mxu0 0.0
    %966 = vmatprep.subr.mxu0 0.0
    %967 = vmatpush1.msra.mxu0 0.0
    %968 = vmatprep.mubr.f32.mxu0 0.0
    %969 = vmatmul.mubr.f32.gmra.mrb[0].mxu0 %v902
    %v970 = vpop.f32.mrb[0].mxu0
    %v971 = vadd.f32 0.0, %v970
    %v972 = vpop.f32.mrb[0].mxu0
    %973 = vdwg.mxu0
    %975 = vrot.lane.b32.xlu0 %v349, 120
    %v976 = vpop.permute.xlu0 %975
    %v979 = vsel %vm394, %v896, 0
    %981 = vmatprep.subr.mxu0 0.0
    %982 = vmatpush1.msra.mxu0 %v976
    %983 = vmatprep.subr.mxu0 0.0
    %984 = vmatpush1.msra.mxu0 0.0
    %985 = vmatprep.subr.mxu0 0.0
    %986 = vmatpush1.msra.mxu0 0.0
    %987 = vmatprep.subr.mxu0 0.0
    %988 = vmatpush1.msra.mxu0 0.0
    %989 = vmatprep.subr.mxu0 0.0
    %990 = vmatpush1.msra.mxu0 0.0
    %991 = vmatprep.subr.mxu0 0.0
    %992 = vmatpush1.msra.mxu0 0.0
    %993 = vmatprep.subr.mxu0 0.0
    %994 = vmatpush1.msra.mxu0 0.0
    %995 = vmatprep.subr.mxu0 0.0
    %996 = vmatpush1.msra.mxu0 0.0
    %997 = vmatprep.subr.mxu0 0.0
    %998 = vmatpush1.msra.mxu0 0.0
    %999 = vmatprep.subr.mxu0 0.0
    %1000 = vmatpush1.msra.mxu0 0.0
    %1001 = vmatprep.subr.mxu0 0.0
    %1002 = vmatpush1.msra.mxu0 0.0
    %1003 = vmatprep.subr.mxu0 0.0
    %1004 = vmatpush1.msra.mxu0 0.0
    %1005 = vmatprep.subr.mxu0 0.0
    %1006 = vmatpush1.msra.mxu0 0.0
    %1007 = vmatprep.subr.mxu0 0.0
    %1008 = vmatpush1.msra.mxu0 0.0
    %1009 = vmatprep.subr.mxu0 0.0
    %1010 = vmatpush1.msra.mxu0 0.0
    %1011 = vmatprep.subr.mxu0 0.0
    %1012 = vmatpush1.msra.mxu0 0.0
    %1013 = vmatprep.subr.mxu0 0.0
    %1014 = vmatpush1.msra.mxu0 0.0
    %1015 = vmatprep.subr.mxu0 0.0
    %1016 = vmatpush1.msra.mxu0 0.0
    %1017 = vmatprep.subr.mxu0 0.0
    %1018 = vmatpush1.msra.mxu0 0.0
    %1019 = vmatprep.subr.mxu0 0.0
    %1020 = vmatpush1.msra.mxu0 0.0
    %1021 = vmatprep.subr.mxu0 0.0
    %1022 = vmatpush1.msra.mxu0 0.0
    %1023 = vmatprep.subr.mxu0 0.0
    %1024 = vmatpush1.msra.mxu0 0.0
    %1025 = vmatprep.subr.mxu0 0.0
    %1026 = vmatpush1.msra.mxu0 0.0
    %1027 = vmatprep.subr.mxu0 0.0
    %1028 = vmatpush1.msra.mxu0 0.0
    %1029 = vmatprep.subr.mxu0 0.0
    %1030 = vmatpush1.msra.mxu0 0.0
    %1031 = vmatprep.subr.mxu0 0.0
    %1032 = vmatpush1.msra.mxu0 0.0
    %1033 = vmatprep.subr.mxu0 0.0
    %1034 = vmatpush1.msra.mxu0 0.0
    %1035 = vmatprep.subr.mxu0 0.0
    %1036 = vmatpush1.msra.mxu0 0.0
    %1037 = vmatprep.subr.mxu0 0.0
    %1038 = vmatpush1.msra.mxu0 0.0
    %1039 = vmatprep.subr.mxu0 0.0
    %1040 = vmatpush1.msra.mxu0 0.0
    %1041 = vmatprep.subr.mxu0 0.0
    %1042 = vmatpush1.msra.mxu0 0.0
    %1043 = vmatprep.subr.mxu0 0.0
    %1044 = vmatpush1.msra.mxu0 0.0
    %1045 = vmatprep.mubr.f32.mxu0 0.0
    %1046 = vmatmul.mubr.f32.gmra.mrb[0].mxu0 %v979
    %v1047 = vpop.f32.mrb[0].mxu0
    %v1048 = vadd.f32 0.0, %v1047
    %v1049 = vpop.f32.mrb[0].mxu0
    %1050 = vdwg.mxu0
    %v1052 = vsel %vm394, %v971, 0
    %v1055 = vsel %vm394, %v1048, 0
    %1057 = vmatprep.subr.mxu0 0.0
    %1058 = vmatpush1.msra.mxu0 %v391
    %1059 = vmatprep.subr.mxu0 0.0
    %1060 = vmatpush1.msra.mxu0 0.0
    %1061 = vmatprep.subr.mxu0 0.0
    %1062 = vmatpush1.msra.mxu0 0.0
    %1063 = vmatprep.subr.mxu0 0.0
    %1064 = vmatpush1.msra.mxu0 0.0
    %1065 = vmatprep.subr.mxu0 0.0
    %1066 = vmatpush1.msra.mxu0 0.0
    %1067 = vmatprep.subr.mxu0 0.0
    %1068 = vmatpush1.msra.mxu0 0.0
    %1069 = vmatprep.subr.mxu0 0.0
    %1070 = vmatpush1.msra.mxu0 0.0
    %1071 = vmatprep.subr.mxu0 0.0
    %1072 = vmatpush1.msra.mxu0 0.0
    %1073 = vmatprep.subr.mxu0 0.0
    %1074 = vmatpush1.msra.mxu0 0.0
    %1075 = vmatprep.subr.mxu0 0.0
    %1076 = vmatpush1.msra.mxu0 0.0
    %1077 = vmatprep.subr.mxu0 0.0
    %1078 = vmatpush1.msra.mxu0 0.0
    %1079 = vmatprep.subr.mxu0 0.0
    %1080 = vmatpush1.msra.mxu0 0.0
    %1081 = vmatprep.subr.mxu0 0.0
    %1082 = vmatpush1.msra.mxu0 0.0
    %1083 = vmatprep.subr.mxu0 0.0
    %1084 = vmatpush1.msra.mxu0 0.0
    %1085 = vmatprep.subr.mxu0 0.0
    %1086 = vmatpush1.msra.mxu0 0.0
    %1087 = vmatprep.subr.mxu0 0.0
    %1088 = vmatpush1.msra.mxu0 0.0
    %1089 = vmatprep.subr.mxu0 0.0
    %1090 = vmatpush1.msra.mxu0 0.0
    %1091 = vmatprep.subr.mxu0 0.0
    %1092 = vmatpush1.msra.mxu0 0.0
    %1093 = vmatprep.subr.mxu0 0.0
    %1094 = vmatpush1.msra.mxu0 0.0
    %1095 = vmatprep.subr.mxu0 0.0
    %1096 = vmatpush1.msra.mxu0 0.0
    %1097 = vmatprep.subr.mxu0 0.0
    %1098 = vmatpush1.msra.mxu0 0.0
    %1099 = vmatprep.subr.mxu0 0.0
    %1100 = vmatpush1.msra.mxu0 0.0
    %1101 = vmatprep.subr.mxu0 0.0
    %1102 = vmatpush1.msra.mxu0 0.0
    %1103 = vmatprep.subr.mxu0 0.0
    %1104 = vmatpush1.msra.mxu0 0.0
    %1105 = vmatprep.subr.mxu0 0.0
    %1106 = vmatpush1.msra.mxu0 0.0
    %1107 = vmatprep.subr.mxu0 0.0
    %1108 = vmatpush1.msra.mxu0 0.0
    %1109 = vmatprep.subr.mxu0 0.0
    %1110 = vmatpush1.msra.mxu0 0.0
    %1111 = vmatprep.subr.mxu0 0.0
    %1112 = vmatpush1.msra.mxu0 0.0
    %1113 = vmatprep.subr.mxu0 0.0
    %1114 = vmatpush1.msra.mxu0 0.0
    %1115 = vmatprep.subr.mxu0 0.0
    %1116 = vmatpush1.msra.mxu0 0.0
    %1117 = vmatprep.subr.mxu0 0.0
    %1118 = vmatpush1.msra.mxu0 0.0
    %1119 = vmatprep.subr.mxu0 0.0
    %1120 = vmatpush1.msra.mxu0 0.0
    %1121 = vmatprep.mubr.f32.mxu0 0.0
    %1122 = vmatmul.mubr.f32.gmra.mrb[0].mxu0 %v1052
    %v1123 = vpop.f32.mrb[0].mxu0
    %v1124 = vadd.f32 0.0, %v1123
    %v1125 = vpop.f32.mrb[0].mxu0
    %1126 = vmatprep.mubr.f32.mxu0 0.0
    %1127 = vmatmul.mubr.f32.gmra.mrb[0].mxu0 %v1055
    %v1128 = vpop.f32.mrb[0].mxu0
    %v1129 = vadd.f32 0.0, %v1128
    %v1130 = vpop.f32.mrb[0].mxu0
    %1131 = vdwg.mxu0
    %v1133 = vsel %vm394, %v646, 0
    %v1136 = vsel %vm394, %v719, 0
    %1138 = vmatprep.subr.mxu0 0.0
    %1139 = vmatpush1.msra.mxu0 %v390
    %1140 = vmatprep.subr.mxu0 0.0
    %1141 = vmatpush1.msra.mxu0 0.0
    %1142 = vmatprep.subr.mxu0 0.0
    %1143 = vmatpush1.msra.mxu0 0.0
    %1144 = vmatprep.subr.mxu0 0.0
    %1145 = vmatpush1.msra.mxu0 0.0
    %1146 = vmatprep.subr.mxu0 0.0
    %1147 = vmatpush1.msra.mxu0 0.0
    %1148 = vmatprep.subr.mxu0 0.0
    %1149 = vmatpush1.msra.mxu0 0.0
    %1150 = vmatprep.subr.mxu0 0.0
    %1151 = vmatpush1.msra.mxu0 0.0
    %1152 = vmatprep.subr.mxu0 0.0
    %1153 = vmatpush1.msra.mxu0 0.0
    %1154 = vmatprep.subr.mxu0 0.0
    %1155 = vmatpush1.msra.mxu0 0.0
    %1156 = vmatprep.subr.mxu0 0.0
    %1157 = vmatpush1.msra.mxu0 0.0
    %1158 = vmatprep.subr.mxu0 0.0
    %1159 = vmatpush1.msra.mxu0 0.0
    %1160 = vmatprep.subr.mxu0 0.0
    %1161 = vmatpush1.msra.mxu0 0.0
    %1162 = vmatprep.subr.mxu0 0.0
    %1163 = vmatpush1.msra.mxu0 0.0
    %1164 = vmatprep.subr.mxu0 0.0
    %1165 = vmatpush1.msra.mxu0 0.0
    %1166 = vmatprep.subr.mxu0 0.0
    %1167 = vmatpush1.msra.mxu0 0.0
    %1168 = vmatprep.subr.mxu0 0.0
    %1169 = vmatpush1.msra.mxu0 0.0
    %1170 = vmatprep.subr.mxu0 0.0
    %1171 = vmatpush1.msra.mxu0 0.0
    %1172 = vmatprep.subr.mxu0 0.0
    %1173 = vmatpush1.msra.mxu0 0.0
    %1174 = vmatprep.subr.mxu0 0.0
    %1175 = vmatpush1.msra.mxu0 0.0
    %1176 = vmatprep.subr.mxu0 0.0
    %1177 = vmatpush1.msra.mxu0 0.0
    %1178 = vmatprep.subr.mxu0 0.0
    %1179 = vmatpush1.msra.mxu0 0.0
    %1180 = vmatprep.subr.mxu0 0.0
    %1181 = vmatpush1.msra.mxu0 0.0
    %1182 = vmatprep.subr.mxu0 0.0
    %1183 = vmatpush1.msra.mxu0 0.0
    %1184 = vmatprep.subr.mxu0 0.0
    %1185 = vmatpush1.msra.mxu0 0.0
    %1186 = vmatprep.subr.mxu0 0.0
    %1187 = vmatpush1.msra.mxu0 0.0
    %1188 = vmatprep.subr.mxu0 0.0
    %1189 = vmatpush1.msra.mxu0 0.0
    %1190 = vmatprep.subr.mxu0 0.0
    %1191 = vmatpush1.msra.mxu0 0.0
    %1192 = vmatprep.subr.mxu0 0.0
    %1193 = vmatpush1.msra.mxu0 0.0
    %1194 = vmatprep.subr.mxu0 0.0
    %1195 = vmatpush1.msra.mxu0 0.0
    %1196 = vmatprep.subr.mxu0 0.0
    %1197 = vmatpush1.msra.mxu0 0.0
    %1198 = vmatprep.subr.mxu0 0.0
    %1199 = vmatpush1.msra.mxu0 0.0
    %1200 = vmatprep.subr.mxu0 0.0
    %1201 = vmatpush1.msra.mxu0 0.0
    %1202 = vmatprep.mubr.f32.mxu0 0.0
    %1203 = vmatmul.mubr.f32.gmra.mrb[0].mxu0 %v1133
    %v1204 = vpop.f32.mrb[0].mxu0
    %v1205 = vadd.f32 %v1124, %v1204
    %v1206 = vpop.f32.mrb[0].mxu0
    %1207 = vmatprep.mubr.f32.mxu0 0.0
    %1208 = vmatmul.mubr.f32.gmra.mrb[0].mxu0 %v1136
    %v1209 = vpop.f32.mrb[0].mxu0
    %v1210 = vadd.f32 %v1129, %v1209
    %v1211 = vpop.f32.mrb[0].mxu0
    %1212 = vdwg.mxu0
    %1213 = vrot.lane.b32.xlu0 %v172, 112
    %v1214 = vpop.permute.xlu0 %1213
    %1215 = vrot.lane.b32.xlu0 %v258, 112
    %v1216 = vpop.permute.xlu0 %1215
    %v1217 = vsel %vm394, %v1214, 0
    %v1219 = vsel %vm394, %v1216, 0
    %1221 = vmatprep.subr.mxu0 0.0
    %1222 = vmatpush1.xpose.msra.mxu0 %v1219
    %1223 = vmatprep.subr.mxu0 0.0
    %1224 = vmatpush1.xpose.msra.mxu0 0.0
    %1225 = vmatprep.subr.mxu0 0.0
    %1226 = vmatpush1.xpose.msra.mxu0 0.0
    %1227 = vmatprep.subr.mxu0 0.0
    %1228 = vmatpush1.xpose.msra.mxu0 0.0
    %1229 = vmatprep.subr.mxu0 0.0
    %1230 = vmatpush1.xpose.msra.mxu0 0.0
    %1231 = vmatprep.subr.mxu0 0.0
    %1232 = vmatpush1.xpose.msra.mxu0 0.0
    %1233 = vmatprep.subr.mxu0 0.0
    %1234 = vmatpush1.xpose.msra.mxu0 0.0
    %1235 = vmatprep.subr.mxu0 0.0
    %1236 = vmatpush1.xpose.msra.mxu0 0.0
    %1237 = vmatprep.subr.mxu0 0.0
    %1238 = vmatpush1.xpose.msra.mxu0 0.0
    %1239 = vmatprep.subr.mxu0 0.0
    %1240 = vmatpush1.xpose.msra.mxu0 0.0
    %1241 = vmatprep.subr.mxu0 0.0
    %1242 = vmatpush1.xpose.msra.mxu0 0.0
    %1243 = vmatprep.subr.mxu0 0.0
    %1244 = vmatpush1.xpose.msra.mxu0 0.0
    %1245 = vmatprep.subr.mxu0 0.0
    %1246 = vmatpush1.xpose.msra.mxu0 0.0
    %1247 = vmatprep.subr.mxu0 0.0
    %1248 = vmatpush1.xpose.msra.mxu0 0.0
    %1249 = vmatprep.subr.mxu0 0.0
    %1250 = vmatpush1.xpose.msra.mxu0 0.0
    %1251 = vmatprep.subr.mxu0 0.0
    %1252 = vmatpush1.xpose.msra.mxu0 0.0
    %1253 = vmatprep.subr.mxu0 0.0
    %1254 = vmatpush1.xpose.msra.mxu0 0.0
    %1255 = vmatprep.subr.mxu0 0.0
    %1256 = vmatpush1.xpose.msra.mxu0 0.0
    %1257 = vmatprep.subr.mxu0 0.0
    %1258 = vmatpush1.xpose.msra.mxu0 0.0
    %1259 = vmatprep.subr.mxu0 0.0
    %1260 = vmatpush1.xpose.msra.mxu0 0.0
    %1261 = vmatprep.subr.mxu0 0.0
    %1262 = vmatpush1.xpose.msra.mxu0 0.0
    %1263 = vmatprep.subr.mxu0 0.0
    %1264 = vmatpush1.xpose.msra.mxu0 0.0
    %1265 = vmatprep.subr.mxu0 0.0
    %1266 = vmatpush1.xpose.msra.mxu0 0.0
    %1267 = vmatprep.subr.mxu0 0.0
    %1268 = vmatpush1.xpose.msra.mxu0 0.0
    %1269 = vmatprep.subr.mxu0 0.0
    %1270 = vmatpush1.xpose.msra.mxu0 0.0
    %1271 = vmatprep.subr.mxu0 0.0
    %1272 = vmatpush1.xpose.msra.mxu0 0.0
    %1273 = vmatprep.subr.mxu0 0.0
    %1274 = vmatpush1.xpose.msra.mxu0 0.0
    %1275 = vmatprep.subr.mxu0 0.0
    %1276 = vmatpush1.xpose.msra.mxu0 0.0
    %1277 = vmatprep.subr.mxu0 0.0
    %1278 = vmatpush1.xpose.msra.mxu0 0.0
    %1279 = vmatprep.subr.mxu0 0.0
    %1280 = vmatpush1.xpose.msra.mxu0 0.0
    %1281 = vmatprep.subr.mxu0 0.0
    %1282 = vmatpush1.xpose.msra.mxu0 0.0
    %1283 = vmatprep.subr.mxu0 0.0
    %1284 = vmatpush1.xpose.msra.mxu0 0.0
    %1285 = vmatprep.mubr.f32.mxu0 0.0
    %1286 = vmatmul.mubr.f32.gmra.mrb[0].mxu0 %v1217
    %v1287 = vpop.f32.mrb[0].mxu0
    %v1288 = vadd.f32 0.0, %v1287
    %v1289 = vpop.f32.mrb[0].mxu0
    %1290 = vdwg.mxu0
    %1291 = vrot.lane.b32.xlu0 %v177, 112
    %v1292 = vpop.permute.xlu0 %1291
    %1293 = vrot.lane.b32.xlu0 %v263, 112
    %v1294 = vpop.permute.xlu0 %1293
    %v1295 = vsel %vm394, %v1292, 0
    %v1297 = vsel %vm394, %v1294, 0
    %1299 = vmatprep.subr.mxu0 0.0
    %1300 = vmatpush1.xpose.msra.mxu0 %v1297
    %1301 = vmatprep.subr.mxu0 0.0
    %1302 = vmatpush1.xpose.msra.mxu0 0.0
    %1303 = vmatprep.subr.mxu0 0.0
    %1304 = vmatpush1.xpose.msra.mxu0 0.0
    %1305 = vmatprep.subr.mxu0 0.0
    %1306 = vmatpush1.xpose.msra.mxu0 0.0
    %1307 = vmatprep.subr.mxu0 0.0
    %1308 = vmatpush1.xpose.msra.mxu0 0.0
    %1309 = vmatprep.subr.mxu0 0.0
    %1310 = vmatpush1.xpose.msra.mxu0 0.0
    %1311 = vmatprep.subr.mxu0 0.0
    %1312 = vmatpush1.xpose.msra.mxu0 0.0
    %1313 = vmatprep.subr.mxu0 0.0
    %1314 = vmatpush1.xpose.msra.mxu0 0.0
    %1315 = vmatprep.subr.mxu0 0.0
    %1316 = vmatpush1.xpose.msra.mxu0 0.0
    %1317 = vmatprep.subr.mxu0 0.0
    %1318 = vmatpush1.xpose.msra.mxu0 0.0
    %1319 = vmatprep.subr.mxu0 0.0
    %1320 = vmatpush1.xpose.msra.mxu0 0.0
    %1321 = vmatprep.subr.mxu0 0.0
    %1322 = vmatpush1.xpose.msra.mxu0 0.0
    %1323 = vmatprep.subr.mxu0 0.0
    %1324 = vmatpush1.xpose.msra.mxu0 0.0
    %1325 = vmatprep.subr.mxu0 0.0
    %1326 = vmatpush1.xpose.msra.mxu0 0.0
    %1327 = vmatprep.subr.mxu0 0.0
    %1328 = vmatpush1.xpose.msra.mxu0 0.0
    %1329 = vmatprep.subr.mxu0 0.0
    %1330 = vmatpush1.xpose.msra.mxu0 0.0
    %1331 = vmatprep.subr.mxu0 0.0
    %1332 = vmatpush1.xpose.msra.mxu0 0.0
    %1333 = vmatprep.subr.mxu0 0.0
    %1334 = vmatpush1.xpose.msra.mxu0 0.0
    %1335 = vmatprep.subr.mxu0 0.0
    %1336 = vmatpush1.xpose.msra.mxu0 0.0
    %1337 = vmatprep.subr.mxu0 0.0
    %1338 = vmatpush1.xpose.msra.mxu0 0.0
    %1339 = vmatprep.subr.mxu0 0.0
    %1340 = vmatpush1.xpose.msra.mxu0 0.0
    %1341 = vmatprep.subr.mxu0 0.0
    %1342 = vmatpush1.xpose.msra.mxu0 0.0
    %1343 = vmatprep.subr.mxu0 0.0
    %1344 = vmatpush1.xpose.msra.mxu0 0.0
    %1345 = vmatprep.subr.mxu0 0.0
    %1346 = vmatpush1.xpose.msra.mxu0 0.0
    %1347 = vmatprep.subr.mxu0 0.0
    %1348 = vmatpush1.xpose.msra.mxu0 0.0
    %1349 = vmatprep.subr.mxu0 0.0
    %1350 = vmatpush1.xpose.msra.mxu0 0.0
    %1351 = vmatprep.subr.mxu0 0.0
    %1352 = vmatpush1.xpose.msra.mxu0 0.0
    %1353 = vmatprep.subr.mxu0 0.0
    %1354 = vmatpush1.xpose.msra.mxu0 0.0
    %1355 = vmatprep.subr.mxu0 0.0
    %1356 = vmatpush1.xpose.msra.mxu0 0.0
    %1357 = vmatprep.subr.mxu0 0.0
    %1358 = vmatpush1.xpose.msra.mxu0 0.0
    %1359 = vmatprep.subr.mxu0 0.0
    %1360 = vmatpush1.xpose.msra.mxu0 0.0
    %1361 = vmatprep.subr.mxu0 0.0
    %1362 = vmatpush1.xpose.msra.mxu0 0.0
    %1363 = vmatprep.mubr.f32.mxu0 0.0
    %1364 = vmatmul.mubr.f32.gmra.mrb[0].mxu0 %v1295
    %v1365 = vpop.f32.mrb[0].mxu0
    %v1366 = vadd.f32 0.0, %v1365
    %v1367 = vpop.f32.mrb[0].mxu0
    %1368 = vdwg.mxu0
    %v1369 = vmul.f32 %v1288, 0.35355338
    %v1370 = vmul.f32 %v1366, 0.35355338
    %v1371 = vmul.f32 %v1369, %v552
    %v1372 = vmul.f32 %v1370, %v556
    %v1373 = vsel %vm394, %v1371, -inf
    %v1374 = vsel %vm394, %v1372, -inf
    %v1375 = vmax.f32 %v1373, %v1374
    %v1376 = vsub.f32 %v1371, %v1375
    %v1377 = vsub.f32 %v1372, %v1375
    %v1378 = vmul.f32 %v1376, 1.442695
    %v1379 = vpow.pop %v1378
    %v1380 = vmul.f32 %v1377, 1.442695
    %v1381 = vpow.pop %v1380
    %v1382 = vsel %vm394, %v1379, 0.0
    %v1383 = vsel %vm394, %v1381, 0.0
    %v1384 = vadd.f32 %v1382, %v1383
    %v1385 = vrcp.pop %v1384
    %v1386 = vmul.f32 %v1379, %v1385
    %v1387 = vmul.f32 %v1381, %v1385
    %1388 = vrot.lane.b32.xlu0 %v344, 112
    %v1389 = vpop.permute.xlu0 %1388
    %v1392 = vsel %vm394, %v1386, 0
    %1394 = vmatprep.subr.mxu0 0.0
    %1395 = vmatpush1.msra.mxu0 %v1389
    %1396 = vmatprep.subr.mxu0 0.0
    %1397 = vmatpush1.msra.mxu0 0.0
    %1398 = vmatprep.subr.mxu0 0.0
    %1399 = vmatpush1.msra.mxu0 0.0
    %1400 = vmatprep.subr.mxu0 0.0
    %1401 = vmatpush1.msra.mxu0 0.0
    %1402 = vmatprep.subr.mxu0 0.0
    %1403 = vmatpush1.msra.mxu0 0.0
    %1404 = vmatprep.subr.mxu0 0.0
    %1405 = vmatpush1.msra.mxu0 0.0
    %1406 = vmatprep.subr.mxu0 0.0
    %1407 = vmatpush1.msra.mxu0 0.0
    %1408 = vmatprep.subr.mxu0 0.0
    %1409 = vmatpush1.msra.mxu0 0.0
    %1410 = vmatprep.subr.mxu0 0.0
    %1411 = vmatpush1.msra.mxu0 0.0
    %1412 = vmatprep.subr.mxu0 0.0
    %1413 = vmatpush1.msra.mxu0 0.0
    %1414 = vmatprep.subr.mxu0 0.0
    %1415 = vmatpush1.msra.mxu0 0.0
    %1416 = vmatprep.subr.mxu0 0.0
    %1417 = vmatpush1.msra.mxu0 0.0
    %1418 = vmatprep.subr.mxu0 0.0
    %1419 = vmatpush1.msra.mxu0 0.0
    %1420 = vmatprep.subr.mxu0 0.0
    %1421 = vmatpush1.msra.mxu0 0.0
    %1422 = vmatprep.subr.mxu0 0.0
    %1423 = vmatpush1.msra.mxu0 0.0
    %1424 = vmatprep.subr.mxu0 0.0
    %1425 = vmatpush1.msra.mxu0 0.0
    %1426 = vmatprep.subr.mxu0 0.0
    %1427 = vmatpush1.msra.mxu0 0.0
    %1428 = vmatprep.subr.mxu0 0.0
    %1429 = vmatpush1.msra.mxu0 0.0
    %1430 = vmatprep.subr.mxu0 0.0
    %1431 = vmatpush1.msra.mxu0 0.0
    %1432 = vmatprep.subr.mxu0 0.0
    %1433 = vmatpush1.msra.mxu0 0.0
    %1434 = vmatprep.subr.mxu0 0.0
    %1435 = vmatpush1.msra.mxu0 0.0
    %1436 = vmatprep.subr.mxu0 0.0
    %1437 = vmatpush1.msra.mxu0 0.0
    %1438 = vmatprep.subr.mxu0 0.0
    %1439 = vmatpush1.msra.mxu0 0.0
    %1440 = vmatprep.subr.mxu0 0.0
    %1441 = vmatpush1.msra.mxu0 0.0
    %1442 = vmatprep.subr.mxu0 0.0
    %1443 = vmatpush1.msra.mxu0 0.0
    %1444 = vmatprep.subr.mxu0 0.0
    %1445 = vmatpush1.msra.mxu0 0.0
    %1446 = vmatprep.subr.mxu0 0.0
    %1447 = vmatpush1.msra.mxu0 0.0
    %1448 = vmatprep.subr.mxu0 0.0
    %1449 = vmatpush1.msra.mxu0 0.0
    %1450 = vmatprep.subr.mxu0 0.0
    %1451 = vmatpush1.msra.mxu0 0.0
    %1452 = vmatprep.subr.mxu0 0.0
    %1453 = vmatpush1.msra.mxu0 0.0
    %1454 = vmatprep.subr.mxu0 0.0
    %1455 = vmatpush1.msra.mxu0 0.0
    %1456 = vmatprep.subr.mxu0 0.0
    %1457 = vmatpush1.msra.mxu0 0.0
    %1458 = vmatprep.mubr.f32.mxu0 0.0
    %1459 = vmatmul.mubr.f32.gmra.mrb[0].mxu0 %v1392
    %v1460 = vpop.f32.mrb[0].mxu0
    %v1461 = vadd.f32 0.0, %v1460
    %v1462 = vpop.f32.mrb[0].mxu0
    %1463 = vdwg.mxu0
    %1464 = vrot.lane.b32.xlu0 %v349, 112
    %v1465 = vpop.permute.xlu0 %1464
    %v1468 = vsel %vm394, %v1387, 0
    %1470 = vmatprep.subr.mxu0 0.0
    %1471 = vmatpush1.msra.mxu0 %v1465
    %1472 = vmatprep.subr.mxu0 0.0
    %1473 = vmatpush1.msra.mxu0 0.0
    %1474 = vmatprep.subr.mxu0 0.0
    %1475 = vmatpush1.msra.mxu0 0.0
    %1476 = vmatprep.subr.mxu0 0.0
    %1477 = vmatpush1.msra.mxu0 0.0
    %1478 = vmatprep.subr.mxu0 0.0
    %1479 = vmatpush1.msra.mxu0 0.0
    %1480 = vmatprep.subr.mxu0 0.0
    %1481 = vmatpush1.msra.mxu0 0.0
    %1482 = vmatprep.subr.mxu0 0.0
    %1483 = vmatpush1.msra.mxu0 0.0
    %1484 = vmatprep.subr.mxu0 0.0
    %1485 = vmatpush1.msra.mxu0 0.0
    %1486 = vmatprep.subr.mxu0 0.0
    %1487 = vmatpush1.msra.mxu0 0.0
    %1488 = vmatprep.subr.mxu0 0.0
    %1489 = vmatpush1.msra.mxu0 0.0
    %1490 = vmatprep.subr.mxu0 0.0
    %1491 = vmatpush1.msra.mxu0 0.0
    %1492 = vmatprep.subr.mxu0 0.0
    %1493 = vmatpush1.msra.mxu0 0.0
    %1494 = vmatprep.subr.mxu0 0.0
    %1495 = vmatpush1.msra.mxu0 0.0
    %1496 = vmatprep.subr.mxu0 0.0
    %1497 = vmatpush1.msra.mxu0 0.0
    %1498 = vmatprep.subr.mxu0 0.0
    %1499 = vmatpush1.msra.mxu0 0.0
    %1500 = vmatprep.subr.mxu0 0.0
    %1501 = vmatpush1.msra.mxu0 0.0
    %1502 = vmatprep.subr.mxu0 0.0
    %1503 = vmatpush1.msra.mxu0 0.0
    %1504 = vmatprep.subr.mxu0 0.0
    %1505 = vmatpush1.msra.mxu0 0.0
    %1506 = vmatprep.subr.mxu0 0.0
    %1507 = vmatpush1.msra.mxu0 0.0
    %1508 = vmatprep.subr.mxu0 0.0
    %1509 = vmatpush1.msra.mxu0 0.0
    %1510 = vmatprep.subr.mxu0 0.0
    %1511 = vmatpush1.msra.mxu0 0.0
    %1512 = vmatprep.subr.mxu0 0.0
    %1513 = vmatpush1.msra.mxu0 0.0
    %1514 = vmatprep.subr.mxu0 0.0
    %1515 = vmatpush1.msra.mxu0 0.0
    %1516 = vmatprep.subr.mxu0 0.0
    %1517 = vmatpush1.msra.mxu0 0.0
    %1518 = vmatprep.subr.mxu0 0.0
    %1519 = vmatpush1.msra.mxu0 0.0
    %1520 = vmatprep.subr.mxu0 0.0
    %1521 = vmatpush1.msra.mxu0 0.0
    %1522 = vmatprep.subr.mxu0 0.0
    %1523 = vmatpush1.msra.mxu0 0.0
    %1524 = vmatprep.subr.mxu0 0.0
    %1525 = vmatpush1.msra.mxu0 0.0
    %1526 = vmatprep.subr.mxu0 0.0
    %1527 = vmatpush1.msra.mxu0 0.0
    %1528 = vmatprep.subr.mxu0 0.0
    %1529 = vmatpush1.msra.mxu0 0.0
    %1530 = vmatprep.subr.mxu0 0.0
    %1531 = vmatpush1.msra.mxu0 0.0
    %1532 = vmatprep.subr.mxu0 0.0
    %1533 = vmatpush1.msra.mxu0 0.0
    %1534 = vmatprep.mubr.f32.mxu0 0.0
    %1535 = vmatmul.mubr.f32.gmra.mrb[0].mxu0 %v1468
    %v1536 = vpop.f32.mrb[0].mxu0
    %v1537 = vadd.f32 0.0, %v1536
    %v1538 = vpop.f32.mrb[0].mxu0
    %1539 = vdwg.mxu0
    %v1541 = vsel %vm394, %v1461, 0
    %v1544 = vsel %vm394, %v1537, 0
    %1546 = vmatprep.subr.mxu0 0.0
    %1547 = vmatpush1.msra.mxu0 %v392
    %1548 = vmatprep.subr.mxu0 0.0
    %1549 = vmatpush1.msra.mxu0 0.0
    %1550 = vmatprep.subr.mxu0 0.0
    %1551 = vmatpush1.msra.mxu0 0.0
    %1552 = vmatprep.subr.mxu0 0.0
    %1553 = vmatpush1.msra.mxu0 0.0
    %1554 = vmatprep.subr.mxu0 0.0
    %1555 = vmatpush1.msra.mxu0 0.0
    %1556 = vmatprep.subr.mxu0 0.0
    %1557 = vmatpush1.msra.mxu0 0.0
    %1558 = vmatprep.subr.mxu0 0.0
    %1559 = vmatpush1.msra.mxu0 0.0
    %1560 = vmatprep.subr.mxu0 0.0
    %1561 = vmatpush1.msra.mxu0 0.0
    %1562 = vmatprep.subr.mxu0 0.0
    %1563 = vmatpush1.msra.mxu0 0.0
    %1564 = vmatprep.subr.mxu0 0.0
    %1565 = vmatpush1.msra.mxu0 0.0
    %1566 = vmatprep.subr.mxu0 0.0
    %1567 = vmatpush1.msra.mxu0 0.0
    %1568 = vmatprep.subr.mxu0 0.0
    %1569 = vmatpush1.msra.mxu0 0.0
    %1570 = vmatprep.subr.mxu0 0.0
    %1571 = vmatpush1.msra.mxu0 0.0
    %1572 = vmatprep.subr.mxu0 0.0
    %1573 = vmatpush1.msra.mxu0 0.0
    %1574 = vmatprep.subr.mxu0 0.0
    %1575 = vmatpush1.msra.mxu0 0.0
    %1576 = vmatprep.subr.mxu0 0.0
    %1577 = vmatpush1.msra.mxu0 0.0
    %1578 = vmatprep.subr.mxu0 0.0
    %1579 = vmatpush1.msra.mxu0 0.0
    %1580 = vmatprep.subr.mxu0 0.0
    %1581 = vmatpush1.msra.mxu0 0.0
    %1582 = vmatprep.subr.mxu0 0.0
    %1583 = vmatpush1.msra.mxu0 0.0
    %1584 = vmatprep.subr.mxu0 0.0
    %1585 = vmatpush1.msra.mxu0 0.0
    %1586 = vmatprep.subr.mxu0 0.0
    %1587 = vmatpush1.msra.mxu0 0.0
    %1588 = vmatprep.subr.mxu0 0.0
    %1589 = vmatpush1.msra.mxu0 0.0
    %1590 = vmatprep.subr.mxu0 0.0
    %1591 = vmatpush1.msra.mxu0 0.0
    %1592 = vmatprep.subr.mxu0 0.0
    %1593 = vmatpush1.msra.mxu0 0.0
    %1594 = vmatprep.subr.mxu0 0.0
    %1595 = vmatpush1.msra.mxu0 0.0
    %1596 = vmatprep.subr.mxu0 0.0
    %1597 = vmatpush1.msra.mxu0 0.0
    %1598 = vmatprep.subr.mxu0 0.0
    %1599 = vmatpush1.msra.mxu0 0.0
    %1600 = vmatprep.subr.mxu0 0.0
    %1601 = vmatpush1.msra.mxu0 0.0
    %1602 = vmatprep.subr.mxu0 0.0
    %1603 = vmatpush1.msra.mxu0 0.0
    %1604 = vmatprep.subr.mxu0 0.0
    %1605 = vmatpush1.msra.mxu0 0.0
    %1606 = vmatprep.subr.mxu0 0.0
    %1607 = vmatpush1.msra.mxu0 0.0
    %1608 = vmatprep.subr.mxu0 0.0
    %1609 = vmatpush1.msra.mxu0 0.0
    %1610 = vmatprep.mubr.f32.mxu0 0.0
    %1611 = vmatmul.mubr.f32.gmra.mrb[0].mxu0 %v1541
    %v1612 = vpop.f32.mrb[0].mxu0
    %v1613 = vadd.f32 0.0, %v1612
    %v1614 = vpop.f32.mrb[0].mxu0
    %1615 = vmatprep.mubr.f32.mxu0 0.0
    %1616 = vmatmul.mubr.f32.gmra.mrb[0].mxu0 %v1544
    %v1617 = vpop.f32.mrb[0].mxu0
    %v1618 = vadd.f32 0.0, %v1617
    %v1619 = vpop.f32.mrb[0].mxu0
    %1620 = vdwg.mxu0
    %v1621 = vadd.f32 %v1205, %v1613
    %v1622 = vadd.f32 %v1210, %v1618
    %1623 = vrot.lane.b32.xlu0 %v172, 104
    %v1624 = vpop.permute.xlu0 %1623
    %1625 = vrot.lane.b32.xlu0 %v258, 104
    %v1626 = vpop.permute.xlu0 %1625
    %v1627 = vsel %vm394, %v1624, 0
    %v1629 = vsel %vm394, %v1626, 0
    %1631 = vmatprep.subr.mxu0 0.0
    %1632 = vmatpush1.xpose.msra.mxu0 %v1629
    %1633 = vmatprep.subr.mxu0 0.0
    %1634 = vmatpush1.xpose.msra.mxu0 0.0
    %1635 = vmatprep.subr.mxu0 0.0
    %1636 = vmatpush1.xpose.msra.mxu0 0.0
    %1637 = vmatprep.subr.mxu0 0.0
    %1638 = vmatpush1.xpose.msra.mxu0 0.0
    %1639 = vmatprep.subr.mxu0 0.0
    %1640 = vmatpush1.xpose.msra.mxu0 0.0
    %1641 = vmatprep.subr.mxu0 0.0
    %1642 = vmatpush1.xpose.msra.mxu0 0.0
    %1643 = vmatprep.subr.mxu0 0.0
    %1644 = vmatpush1.xpose.msra.mxu0 0.0
    %1645 = vmatprep.subr.mxu0 0.0
    %1646 = vmatpush1.xpose.msra.mxu0 0.0
    %1647 = vmatprep.subr.mxu0 0.0
    %1648 = vmatpush1.xpose.msra.mxu0 0.0
    %1649 = vmatprep.subr.mxu0 0.0
    %1650 = vmatpush1.xpose.msra.mxu0 0.0
    %1651 = vmatprep.subr.mxu0 0.0
    %1652 = vmatpush1.xpose.msra.mxu0 0.0
    %1653 = vmatprep.subr.mxu0 0.0
    %1654 = vmatpush1.xpose.msra.mxu0 0.0
    %1655 = vmatprep.subr.mxu0 0.0
    %1656 = vmatpush1.xpose.msra.mxu0 0.0
    %1657 = vmatprep.subr.mxu0 0.0
    %1658 = vmatpush1.xpose.msra.mxu0 0.0
    %1659 = vmatprep.subr.mxu0 0.0
    %1660 = vmatpush1.xpose.msra.mxu0 0.0
    %1661 = vmatprep.subr.mxu0 0.0
    %1662 = vmatpush1.xpose.msra.mxu0 0.0
    %1663 = vmatprep.subr.mxu0 0.0
    %1664 = vmatpush1.xpose.msra.mxu0 0.0
    %1665 = vmatprep.subr.mxu0 0.0
    %1666 = vmatpush1.xpose.msra.mxu0 0.0
    %1667 = vmatprep.subr.mxu0 0.0
    %1668 = vmatpush1.xpose.msra.mxu0 0.0
    %1669 = vmatprep.subr.mxu0 0.0
    %1670 = vmatpush1.xpose.msra.mxu0 0.0
    %1671 = vmatprep.subr.mxu0 0.0
    %1672 = vmatpush1.xpose.msra.mxu0 0.0
    %1673 = vmatprep.subr.mxu0 0.0
    %1674 = vmatpush1.xpose.msra.mxu0 0.0
    %1675 = vmatprep.subr.mxu0 0.0
    %1676 = vmatpush1.xpose.msra.mxu0 0.0
    %1677 = vmatprep.subr.mxu0 0.0
    %1678 = vmatpush1.xpose.msra.mxu0 0.0
    %1679 = vmatprep.subr.mxu0 0.0
    %1680 = vmatpush1.xpose.msra.mxu0 0.0
    %1681 = vmatprep.subr.mxu0 0.0
    %1682 = vmatpush1.xpose.msra.mxu0 0.0
    %1683 = vmatprep.subr.mxu0 0.0
    %1684 = vmatpush1.xpose.msra.mxu0 0.0
    %1685 = vmatprep.subr.mxu0 0.0
    %1686 = vmatpush1.xpose.msra.mxu0 0.0
    %1687 = vmatprep.subr.mxu0 0.0
    %1688 = vmatpush1.xpose.msra.mxu0 0.0
    %1689 = vmatprep.subr.mxu0 0.0
    %1690 = vmatpush1.xpose.msra.mxu0 0.0
    %1691 = vmatprep.subr.mxu0 0.0
    %1692 = vmatpush1.xpose.msra.mxu0 0.0
    %1693 = vmatprep.subr.mxu0 0.0
    %1694 = vmatpush1.xpose.msra.mxu0 0.0
    %1695 = vmatprep.mubr.f32.mxu0 0.0
    %1696 = vmatmul.mubr.f32.gmra.mrb[0].mxu0 %v1627
    %v1697 = vpop.f32.mrb[0].mxu0
    %v1698 = vadd.f32 0.0, %v1697
    %v1699 = vpop.f32.mrb[0].mxu0
    %1700 = vdwg.mxu0
    %1701 = vrot.lane.b32.xlu0 %v177, 104
    %v1702 = vpop.permute.xlu0 %1701
    %1703 = vrot.lane.b32.xlu0 %v263, 104
    %v1704 = vpop.permute.xlu0 %1703
    %v1705 = vsel %vm394, %v1702, 0
    %v1707 = vsel %vm394, %v1704, 0
    %1709 = vmatprep.subr.mxu0 0.0
    %1710 = vmatpush1.xpose.msra.mxu0 %v1707
    %1711 = vmatprep.subr.mxu0 0.0
    %1712 = vmatpush1.xpose.msra.mxu0 0.0
    %1713 = vmatprep.subr.mxu0 0.0
    %1714 = vmatpush1.xpose.msra.mxu0 0.0
    %1715 = vmatprep.subr.mxu0 0.0
    %1716 = vmatpush1.xpose.msra.mxu0 0.0
    %1717 = vmatprep.subr.mxu0 0.0
    %1718 = vmatpush1.xpose.msra.mxu0 0.0
    %1719 = vmatprep.subr.mxu0 0.0
    %1720 = vmatpush1.xpose.msra.mxu0 0.0
    %1721 = vmatprep.subr.mxu0 0.0
    %1722 = vmatpush1.xpose.msra.mxu0 0.0
    %1723 = vmatprep.subr.mxu0 0.0
    %1724 = vmatpush1.xpose.msra.mxu0 0.0
    %1725 = vmatprep.subr.mxu0 0.0
    %1726 = vmatpush1.xpose.msra.mxu0 0.0
    %1727 = vmatprep.subr.mxu0 0.0
    %1728 = vmatpush1.xpose.msra.mxu0 0.0
    %1729 = vmatprep.subr.mxu0 0.0
    %1730 = vmatpush1.xpose.msra.mxu0 0.0
    %1731 = vmatprep.subr.mxu0 0.0
    %1732 = vmatpush1.xpose.msra.mxu0 0.0
    %1733 = vmatprep.subr.mxu0 0.0
    %1734 = vmatpush1.xpose.msra.mxu0 0.0
    %1735 = vmatprep.subr.mxu0 0.0
    %1736 = vmatpush1.xpose.msra.mxu0 0.0
    %1737 = vmatprep.subr.mxu0 0.0
    %1738 = vmatpush1.xpose.msra.mxu0 0.0
    %1739 = vmatprep.subr.mxu0 0.0
    %1740 = vmatpush1.xpose.msra.mxu0 0.0
    %1741 = vmatprep.subr.mxu0 0.0
    %1742 = vmatpush1.xpose.msra.mxu0 0.0
    %1743 = vmatprep.subr.mxu0 0.0
    %1744 = vmatpush1.xpose.msra.mxu0 0.0
    %1745 = vmatprep.subr.mxu0 0.0
    %1746 = vmatpush1.xpose.msra.mxu0 0.0
    %1747 = vmatprep.subr.mxu0 0.0
    %1748 = vmatpush1.xpose.msra.mxu0 0.0
    %1749 = vmatprep.subr.mxu0 0.0
    %1750 = vmatpush1.xpose.msra.mxu0 0.0
    %1751 = vmatprep.subr.mxu0 0.0
    %1752 = vmatpush1.xpose.msra.mxu0 0.0
    %1753 = vmatprep.subr.mxu0 0.0
    %1754 = vmatpush1.xpose.msra.mxu0 0.0
    %1755 = vmatprep.subr.mxu0 0.0
    %1756 = vmatpush1.xpose.msra.mxu0 0.0
    %1757 = vmatprep.subr.mxu0 0.0
    %1758 = vmatpush1.xpose.msra.mxu0 0.0
    %1759 = vmatprep.subr.mxu0 0.0
    %1760 = vmatpush1.xpose.msra.mxu0 0.0
    %1761 = vmatprep.subr.mxu0 0.0
    %1762 = vmatpush1.xpose.msra.mxu0 0.0
    %1763 = vmatprep.subr.mxu0 0.0
    %1764 = vmatpush1.xpose.msra.mxu0 0.0
    %1765 = vmatprep.subr.mxu0 0.0
    %1766 = vmatpush1.xpose.msra.mxu0 0.0
    %1767 = vmatprep.subr.mxu0 0.0
    %1768 = vmatpush1.xpose.msra.mxu0 0.0
    %1769 = vmatprep.subr.mxu0 0.0
    %1770 = vmatpush1.xpose.msra.mxu0 0.0
    %1771 = vmatprep.subr.mxu0 0.0
    %1772 = vmatpush1.xpose.msra.mxu0 0.0
    %1773 = vmatprep.mubr.f32.mxu0 0.0
    %1774 = vmatmul.mubr.f32.gmra.mrb[0].mxu0 %v1705
    %v1775 = vpop.f32.mrb[0].mxu0
    %v1776 = vadd.f32 0.0, %v1775
    %v1777 = vpop.f32.mrb[0].mxu0
    %1778 = vdwg.mxu0
    %v1779 = vmul.f32 %v1698, 0.35355338
    %v1780 = vmul.f32 %v1776, 0.35355338
    %v1781 = vmul.f32 %v1779, %v552
    %v1782 = vmul.f32 %v1780, %v556
    %v1783 = vsel %vm394, %v1781, -inf
    %v1784 = vsel %vm394, %v1782, -inf
    %v1785 = vmax.f32 %v1783, %v1784
    %v1786 = vsub.f32 %v1781, %v1785
    %v1787 = vsub.f32 %v1782, %v1785
    %v1788 = vmul.f32 %v1786, 1.442695
    %v1789 = vpow.pop %v1788
    %v1790 = vmul.f32 %v1787, 1.442695
    %v1791 = vpow.pop %v1790
    %v1792 = vsel %vm394, %v1789, 0.0
    %v1793 = vsel %vm394, %v1791, 0.0
    %v1794 = vadd.f32 %v1792, %v1793
    %v1795 = vrcp.pop %v1794
    %v1796 = vmul.f32 %v1789, %v1795
    %v1797 = vmul.f32 %v1791, %v1795
    %1798 = vrot.lane.b32.xlu0 %v344, 104
    %v1799 = vpop.permute.xlu0 %1798
    %v1802 = vsel %vm394, %v1796, 0
    %1804 = vmatprep.subr.mxu0 0.0
    %1805 = vmatpush1.msra.mxu0 %v1799
    %1806 = vmatprep.subr.mxu0 0.0
    %1807 = vmatpush1.msra.mxu0 0.0
    %1808 = vmatprep.subr.mxu0 0.0
    %1809 = vmatpush1.msra.mxu0 0.0
    %1810 = vmatprep.subr.mxu0 0.0
    %1811 = vmatpush1.msra.mxu0 0.0
    %1812 = vmatprep.subr.mxu0 0.0
    %1813 = vmatpush1.msra.mxu0 0.0
    %1814 = vmatprep.subr.mxu0 0.0
    %1815 = vmatpush1.msra.mxu0 0.0
    %1816 = vmatprep.subr.mxu0 0.0
    %1817 = vmatpush1.msra.mxu0 0.0
    %1818 = vmatprep.subr.mxu0 0.0
    %1819 = vmatpush1.msra.mxu0 0.0
    %1820 = vmatprep.subr.mxu0 0.0
    %1821 = vmatpush1.msra.mxu0 0.0
    %1822 = vmatprep.subr.mxu0 0.0
    %1823 = vmatpush1.msra.mxu0 0.0
    %1824 = vmatprep.subr.mxu0 0.0
    %1825 = vmatpush1.msra.mxu0 0.0
    %1826 = vmatprep.subr.mxu0 0.0
    %1827 = vmatpush1.msra.mxu0 0.0
    %1828 = vmatprep.subr.mxu0 0.0
    %1829 = vmatpush1.msra.mxu0 0.0
    %1830 = vmatprep.subr.mxu0 0.0
    %1831 = vmatpush1.msra.mxu0 0.0
    %1832 = vmatprep.subr.mxu0 0.0
    %1833 = vmatpush1.msra.mxu0 0.0
    %1834 = vmatprep.subr.mxu0 0.0
    %1835 = vmatpush1.msra.mxu0 0.0
    %1836 = vmatprep.subr.mxu0 0.0
    %1837 = vmatpush1.msra.mxu0 0.0
    %1838 = vmatprep.subr.mxu0 0.0
    %1839 = vmatpush1.msra.mxu0 0.0
    %1840 = vmatprep.subr.mxu0 0.0
    %1841 = vmatpush1.msra.mxu0 0.0
    %1842 = vmatprep.subr.mxu0 0.0
    %1843 = vmatpush1.msra.mxu0 0.0
    %1844 = vmatprep.subr.mxu0 0.0
    %1845 = vmatpush1.msra.mxu0 0.0
    %1846 = vmatprep.subr.mxu0 0.0
    %1847 = vmatpush1.msra.mxu0 0.0
    %1848 = vmatprep.subr.mxu0 0.0
    %1849 = vmatpush1.msra.mxu0 0.0
    %1850 = vmatprep.subr.mxu0 0.0
    %1851 = vmatpush1.msra.mxu0 0.0
    %1852 = vmatprep.subr.mxu0 0.0
    %1853 = vmatpush1.msra.mxu0 0.0
    %1854 = vmatprep.subr.mxu0 0.0
    %1855 = vmatpush1.msra.mxu0 0.0
    %1856 = vmatprep.subr.mxu0 0.0
    %1857 = vmatpush1.msra.mxu0 0.0
    %1858 = vmatprep.subr.mxu0 0.0
    %1859 = vmatpush1.msra.mxu0 0.0
    %1860 = vmatprep.subr.mxu0 0.0
    %1861 = vmatpush1.msra.mxu0 0.0
    %1862 = vmatprep.subr.mxu0 0.0
    %1863 = vmatpush1.msra.mxu0 0.0
    %1864 = vmatprep.subr.mxu0 0.0
    %1865 = vmatpush1.msra.mxu0 0.0
    %1866 = vmatprep.subr.mxu0 0.0
    %1867 = vmatpush1.msra.mxu0 0.0
    %1868 = vmatprep.mubr.f32.mxu0 0.0
    %1869 = vmatmul.mubr.f32.gmra.mrb[0].mxu0 %v1802
    %v1870 = vpop.f32.mrb[0].mxu0
    %v1871 = vadd.f32 0.0, %v1870
    %v1872 = vpop.f32.mrb[0].mxu0
    %1873 = vdwg.mxu0
    %1874 = vrot.lane.b32.xlu0 %v349, 104
    %v1875 = vpop.permute.xlu0 %1874
    %v1878 = vsel %vm394, %v1797, 0
    %1880 = vmatprep.subr.mxu0 0.0
    %1881 = vmatpush1.msra.mxu0 %v1875
    %1882 = vmatprep.subr.mxu0 0.0
    %1883 = vmatpush1.msra.mxu0 0.0
    %1884 = vmatprep.subr.mxu0 0.0
    %1885 = vmatpush1.msra.mxu0 0.0
    %1886 = vmatprep.subr.mxu0 0.0
    %1887 = vmatpush1.msra.mxu0 0.0
    %1888 = vmatprep.subr.mxu0 0.0
    %1889 = vmatpush1.msra.mxu0 0.0
    %1890 = vmatprep.subr.mxu0 0.0
    %1891 = vmatpush1.msra.mxu0 0.0
    %1892 = vmatprep.subr.mxu0 0.0
    %1893 = vmatpush1.msra.mxu0 0.0
    %1894 = vmatprep.subr.mxu0 0.0
    %1895 = vmatpush1.msra.mxu0 0.0
    %1896 = vmatprep.subr.mxu0 0.0
    %1897 = vmatpush1.msra.mxu0 0.0
    %1898 = vmatprep.subr.mxu0 0.0
    %1899 = vmatpush1.msra.mxu0 0.0
    %1900 = vmatprep.subr.mxu0 0.0
    %1901 = vmatpush1.msra.mxu0 0.0
    %1902 = vmatprep.subr.mxu0 0.0
    %1903 = vmatpush1.msra.mxu0 0.0
    %1904 = vmatprep.subr.mxu0 0.0
    %1905 = vmatpush1.msra.mxu0 0.0
    %1906 = vmatprep.subr.mxu0 0.0
    %1907 = vmatpush1.msra.mxu0 0.0
    %1908 = vmatprep.subr.mxu0 0.0
    %1909 = vmatpush1.msra.mxu0 0.0
    %1910 = vmatprep.subr.mxu0 0.0
    %1911 = vmatpush1.msra.mxu0 0.0
    %1912 = vmatprep.subr.mxu0 0.0
    %1913 = vmatpush1.msra.mxu0 0.0
    %1914 = vmatprep.subr.mxu0 0.0
    %1915 = vmatpush1.msra.mxu0 0.0
    %1916 = vmatprep.subr.mxu0 0.0
    %1917 = vmatpush1.msra.mxu0 0.0
    %1918 = vmatprep.subr.mxu0 0.0
    %1919 = vmatpush1.msra.mxu0 0.0
    %1920 = vmatprep.subr.mxu0 0.0
    %1921 = vmatpush1.msra.mxu0 0.0
    %1922 = vmatprep.subr.mxu0 0.0
    %1923 = vmatpush1.msra.mxu0 0.0
    %1924 = vmatprep.subr.mxu0 0.0
    %1925 = vmatpush1.msra.mxu0 0.0
    %1926 = vmatprep.subr.mxu0 0.0
    %1927 = vmatpush1.msra.mxu0 0.0
    %1928 = vmatprep.subr.mxu0 0.0
    %1929 = vmatpush1.msra.mxu0 0.0
    %1930 = vmatprep.subr.mxu0 0.0
    %1931 = vmatpush1.msra.mxu0 0.0
    %1932 = vmatprep.subr.mxu0 0.0
    %1933 = vmatpush1.msra.mxu0 0.0
    %1934 = vmatprep.subr.mxu0 0.0
    %1935 = vmatpush1.msra.mxu0 0.0
    %1936 = vmatprep.subr.mxu0 0.0
    %1937 = vmatpush1.msra.mxu0 0.0
    %1938 = vmatprep.subr.mxu0 0.0
    %1939 = vmatpush1.msra.mxu0 0.0
    %1940 = vmatprep.subr.mxu0 0.0
    %1941 = vmatpush1.msra.mxu0 0.0
    %1942 = vmatprep.subr.mxu0 0.0
    %1943 = vmatpush1.msra.mxu0 0.0
    %1944 = vmatprep.mubr.f32.mxu0 0.0
    %1945 = vmatmul.mubr.f32.gmra.mrb[0].mxu0 %v1878
    %v1946 = vpop.f32.mrb[0].mxu0
    %v1947 = vadd.f32 0.0, %v1946
    %v1948 = vpop.f32.mrb[0].mxu0
    %1949 = vdwg.mxu0
    %v1951 = vsel %vm394, %v1871, 0
    %v1954 = vsel %vm394, %v1947, 0
    %1956 = vmatprep.subr.mxu0 0.0
    %1957 = vmatpush1.msra.mxu0 %v393
    %1958 = vmatprep.subr.mxu0 0.0
    %1959 = vmatpush1.msra.mxu0 0.0
    %1960 = vmatprep.subr.mxu0 0.0
    %1961 = vmatpush1.msra.mxu0 0.0
    %1962 = vmatprep.subr.mxu0 0.0
    %1963 = vmatpush1.msra.mxu0 0.0
    %1964 = vmatprep.subr.mxu0 0.0
    %1965 = vmatpush1.msra.mxu0 0.0
    %1966 = vmatprep.subr.mxu0 0.0
    %1967 = vmatpush1.msra.mxu0 0.0
    %1968 = vmatprep.subr.mxu0 0.0
    %1969 = vmatpush1.msra.mxu0 0.0
    %1970 = vmatprep.subr.mxu0 0.0
    %1971 = vmatpush1.msra.mxu0 0.0
    %1972 = vmatprep.subr.mxu0 0.0
    %1973 = vmatpush1.msra.mxu0 0.0
    %1974 = vmatprep.subr.mxu0 0.0
    %1975 = vmatpush1.msra.mxu0 0.0
    %1976 = vmatprep.subr.mxu0 0.0
    %1977 = vmatpush1.msra.mxu0 0.0
    %1978 = vmatprep.subr.mxu0 0.0
    %1979 = vmatpush1.msra.mxu0 0.0
    %1980 = vmatprep.subr.mxu0 0.0
    %1981 = vmatpush1.msra.mxu0 0.0
    %1982 = vmatprep.subr.mxu0 0.0
    %1983 = vmatpush1.msra.mxu0 0.0
    %1984 = vmatprep.subr.mxu0 0.0
    %1985 = vmatpush1.msra.mxu0 0.0
    %1986 = vmatprep.subr.mxu0 0.0
    %1987 = vmatpush1.msra.mxu0 0.0
    %1988 = vmatprep.subr.mxu0 0.0
    %1989 = vmatpush1.msra.mxu0 0.0
    %1990 = vmatprep.subr.mxu0 0.0
    %1991 = vmatpush1.msra.mxu0 0.0
    %1992 = vmatprep.subr.mxu0 0.0
    %1993 = vmatpush1.msra.mxu0 0.0
    %1994 = vmatprep.subr.mxu0 0.0
    %1995 = vmatpush1.msra.mxu0 0.0
    %1996 = vmatprep.subr.mxu0 0.0
    %1997 = vmatpush1.msra.mxu0 0.0
    %1998 = vmatprep.subr.mxu0 0.0
    %1999 = vmatpush1.msra.mxu0 0.0
    %2000 = vmatprep.subr.mxu0 0.0
    %2001 = vmatpush1.msra.mxu0 0.0
    %2002 = vmatprep.subr.mxu0 0.0
    %2003 = vmatpush1.msra.mxu0 0.0
    %2004 = vmatprep.subr.mxu0 0.0
    %2005 = vmatpush1.msra.mxu0 0.0
    %2006 = vmatprep.subr.mxu0 0.0
    %2007 = vmatpush1.msra.mxu0 0.0
    %2008 = vmatprep.subr.mxu0 0.0
    %2009 = vmatpush1.msra.mxu0 0.0
    %2010 = vmatprep.subr.mxu0 0.0
    %2011 = vmatpush1.msra.mxu0 0.0
    %2012 = vmatprep.subr.mxu0 0.0
    %2013 = vmatpush1.msra.mxu0 0.0
    %2014 = vmatprep.subr.mxu0 0.0
    %2015 = vmatpush1.msra.mxu0 0.0
    %2016 = vmatprep.subr.mxu0 0.0
    %2017 = vmatpush1.msra.mxu0 0.0
    %2018 = vmatprep.subr.mxu0 0.0
    %2019 = vmatpush1.msra.mxu0 0.0
    %2020 = vmatprep.mubr.f32.mxu0 0.0
    %2021 = vmatmul.mubr.f32.gmra.mrb[0].mxu0 %v1951
    %v2022 = vpop.f32.mrb[0].mxu0
    %v2023 = vadd.f32 0.0, %v2022
    %v2024 = vpop.f32.mrb[0].mxu0
    %2025 = vmatprep.mubr.f32.mxu0 0.0
    %2026 = vmatmul.mubr.f32.gmra.mrb[0].mxu0 %v1954
    %v2027 = vpop.f32.mrb[0].mxu0
    %v2028 = vadd.f32 0.0, %v2027
    %v2029 = vpop.f32.mrb[0].mxu0
    %2030 = vdwg.mxu0
    %v2031 = vadd.f32 %v1621, %v2023
    %v2032 = vadd.f32 %v1622, %v2028
    %v2033 = vld [vmem:[%s9] sm:$0x1]
    %v2035 = vlaneseq
    %v2036 = vshrl.u32 %v2035, 7
    %v2037 = vsub.s32 0, %v2036
    %v2038 = vrot.slane %v2033, %v2037
    %v2040 = vadd.f32 %v2031, %v2038
    %v2041 = vadd.f32 %v2032, %v2038
    %v2042 = vadd.f32 %v2040, %v85
    %v2043 = vadd.f32 %v2041, %v86
    %v2044 = vld [vmem:[%s10] sm:$0x1]
    %v2045 = vld [vmem:[%s11] sm:$0x1]
    %v2046 = vsel %vm98, %v2042, 0.0
    %2047 = vadd.xlane.f32.xlu0 %v2046
    %v2048 = vpop.xlane.xlu0 %2047
    %v2049 = vsel %vm98, %v2043, 0.0
    %2050 = vadd.xlane.f32.xlu0 %v2049
    %v2051 = vpop.xlane.xlu0 %2050
    %v2052 = vrcp.pop 32.0
    %v2053 = vmul.f32 %v2048, %v2052
    %v2054 = vmul.f32 %v2051, %v2052
    %v2055 = vsub.f32 %v2042, %v2053
    %v2056 = vsub.f32 %v2043, %v2054
    %v2057 = vmul.f32 %v2055, %v2055
    %v2058 = vmul.f32 %v2056, %v2056
    %v2059 = vsel %vm98, %v2057, 0.0
    %2060 = vadd.xlane.f32.xlu0 %v2059
    %v2061 = vpop.xlane.xlu0 %2060
    %v2062 = vsel %vm98, %v2058, 0.0
    %2063 = vadd.xlane.f32.xlu0 %v2062
    %v2064 = vpop.xlane.xlu0 %2063
    %v2065 = vmul.f32 %v2061, %v2052
    %v2066 = vmul.f32 %v2064, %v2052
    %v2067 = vadd.f32 %v2065, 1e-05
    %v2068 = vadd.f32 %v2066, 1e-05
    %v2069 = vrsqrt.pop %v2067
    %v2070 = vrsqrt.pop %v2068
    %v2071 = vmul.f32 %v2055, %v2069
    %v2072 = vmul.f32 %v2056, %v2070
    %v2074 = vlaneseq
    %v2075 = vshrl.u32 %v2074, 7
    %v2076 = vsub.s32 0, %v2075
    %v2077 = vrot.slane %v2044, %v2076
    %v2079 = vmul.f32 %v2071, %v2077
    %v2080 = vmul.f32 %v2072, %v2077
    %v2082 = vlaneseq
    %v2083 = vshrl.u32 %v2082, 7
    %v2084 = vsub.s32 0, %v2083
    %v2085 = vrot.slane %v2045, %v2084
    %v2087 = vadd.f32 %v2079, %v2085
    %v2088 = vadd.f32 %v2080, %v2085
    %v2089 = vld [vmem:[%s12] sm:$0xff]
    %v2090 = vld [vmem:[%s12 + $0x8] sm:$0xff]
    %v2091 = vld [vmem:[%s12 + $0x10] sm:$0xff]
    %v2092 = vld [vmem:[%s12 + $0x18] sm:$0xff]
    %v2093 = vld [vmem:[%s13] sm:$0x1]
    %v2095 = vlaneseq
    %v2096 = vshrl.u32 %v2095, 7
    %v2097 = vsub.s32 0, %v2096
    %v2098 = vrot.slane %v2093, %v2097
    %v2101 = vsel %vm98, %v2087, 0
    %v2104 = vsel %vm98, %v2088, 0
    %2106 = vmatprep.subr.mxu0 0.0
    %2107 = vmatpush1.msra.mxu0 %v2089
    %2108 = vmatprep.subr.mxu0 0.0
    %2109 = vmatpush1.msra.mxu0 %v2090
    %2110 = vmatprep.subr.mxu0 0.0
    %2111 = vmatpush1.msra.mxu0 %v2091
    %2112 = vmatprep.subr.mxu0 0.0
    %2113 = vmatpush1.msra.mxu0 %v2092
    %2114 = vmatprep.subr.mxu0 0.0
    %2115 = vmatpush1.msra.mxu0 0.0
    %2116 = vmatprep.subr.mxu0 0.0
    %2117 = vmatpush1.msra.mxu0 0.0
    %2118 = vmatprep.subr.mxu0 0.0
    %2119 = vmatpush1.msra.mxu0 0.0
    %2120 = vmatprep.subr.mxu0 0.0
    %2121 = vmatpush1.msra.mxu0 0.0
    %2122 = vmatprep.subr.mxu0 0.0
    %2123 = vmatpush1.msra.mxu0 0.0
    %2124 = vmatprep.subr.mxu0 0.0
    %2125 = vmatpush1.msra.mxu0 0.0
    %2126 = vmatprep.subr.mxu0 0.0
    %2127 = vmatpush1.msra.mxu0 0.0
    %2128 = vmatprep.subr.mxu0 0.0
    %2129 = vmatpush1.msra.mxu0 0.0
    %2130 = vmatprep.subr.mxu0 0.0
    %2131 = vmatpush1.msra.mxu0 0.0
    %2132 = vmatprep.subr.mxu0 0.0
    %2133 = vmatpush1.msra.mxu0 0.0
    %2134 = vmatprep.subr.mxu0 0.0
    %2135 = vmatpush1.msra.mxu0 0.0
    %2136 = vmatprep.subr.mxu0 0.0
    %2137 = vmatpush1.msra.mxu0 0.0
    %2138 = vmatprep.subr.mxu0 0.0
    %2139 = vmatpush1.msra.mxu0 0.0
    %2140 = vmatprep.subr.mxu0 0.0
    %2141 = vmatpush1.msra.mxu0 0.0
    %2142 = vmatprep.subr.mxu0 0.0
    %2143 = vmatpush1.msra.mxu0 0.0
    %2144 = vmatprep.subr.mxu0 0.0
    %2145 = vmatpush1.msra.mxu0 0.0
    %2146 = vmatprep.subr.mxu0 0.0
    %2147 = vmatpush1.msra.mxu0 0.0
    %2148 = vmatprep.subr.mxu0 0.0
    %2149 = vmatpush1.msra.mxu0 0.0
    %2150 = vmatprep.subr.mxu0 0.0
    %2151 = vmatpush1.msra.mxu0 0.0
    %2152 = vmatprep.subr.mxu0 0.0
    %2153 = vmatpush1.msra.mxu0 0.0
    %2154 = vmatprep.subr.mxu0 0.0
    %2155 = vmatpush1.msra.mxu0 0.0
    %2156 = vmatprep.subr.mxu0 0.0
    %2157 = vmatpush1.msra.mxu0 0.0
    %2158 = vmatprep.subr.mxu0 0.0
    %2159 = vmatpush1.msra.mxu0 0.0
    %2160 = vmatprep.subr.mxu0 0.0
    %2161 = vmatpush1.msra.mxu0 0.0
    %2162 = vmatprep.subr.mxu0 0.0
    %2163 = vmatpush1.msra.mxu0 0.0
    %2164 = vmatprep.subr.mxu0 0.0
    %2165 = vmatpush1.msra.mxu0 0.0
    %2166 = vmatprep.subr.mxu0 0.0
    %2167 = vmatpush1.msra.mxu0 0.0
    %2168 = vmatprep.subr.mxu0 0.0
    %2169 = vmatpush1.msra.mxu0 0.0
    %2170 = vmatprep.mubr.f32.mxu0 0.0
    %2171 = vmatmul.mubr.f32.gmra.mrb[0].mxu0 %v2101
    %v2172 = vpop.f32.mrb[0].mxu0
    %v2173 = vadd.f32 %v2098, %v2172
    %v2174 = vpop.f32.mrb[0].mxu0
    %2175 = vmatprep.mubr.f32.mxu0 0.0
    %2176 = vmatmul.mubr.f32.gmra.mrb[0].mxu0 %v2104
    %v2177 = vpop.f32.mrb[0].mxu0
    %v2178 = vadd.f32 %v2098, %v2177
    %v2179 = vpop.f32.mrb[0].mxu0
    %2180 = vdwg.mxu0
    %v2181 = vmax.f32 %v2173, 0.0
    %v2182 = vmax.f32 %v2178, 0.0
    %v2183 = vld [vmem:[%s14] sm:$0xff]
    %v2184 = vld [vmem:[%s14 + $0x8] sm:$0xff]
    %v2185 = vld [vmem:[%s14 + $0x10] sm:$0xff]
    %v2186 = vld [vmem:[%s14 + $0x18] sm:$0xff]
    %v2187 = vld [vmem:[%s14 + $0x20] sm:$0xff]
    %v2188 = vld [vmem:[%s14 + $0x28] sm:$0xff]
    %v2189 = vld [vmem:[%s14 + $0x30] sm:$0xff]
    %v2190 = vld [vmem:[%s14 + $0x38] sm:$0xff]
    %v2191 = vld [vmem:[%s14 + $0x40] sm:$0xff]
    %v2192 = vld [vmem:[%s14 + $0x48] sm:$0xff]
    %v2193 = vld [vmem:[%s14 + $0x50] sm:$0xff]
    %v2194 = vld [vmem:[%s14 + $0x58] sm:$0xff]
    %v2195 = vld [vmem:[%s14 + $0x60] sm:$0xff]
    %v2196 = vld [vmem:[%s14 + $0x68] sm:$0xff]
    %v2197 = vld [vmem:[%s14 + $0x70] sm:$0xff]
    %v2198 = vld [vmem:[%s14 + $0x78] sm:$0xff]
    %v2199 = vld [vmem:[%s15] sm:$0x1]
    %v2201 = vlaneseq
    %v2202 = vshrl.u32 %v2201, 7
    %v2203 = vsub.s32 0, %v2202
    %v2204 = vrot.slane %v2199, %v2203
    %2206 = vmatprep.subr.mxu0 0.0
    %2207 = vmatpush1.msra.mxu0 %v2183
    %2208 = vmatprep.subr.mxu0 0.0
    %2209 = vmatpush1.msra.mxu0 %v2184
    %2210 = vmatprep.subr.mxu0 0.0
    %2211 = vmatpush1.msra.mxu0 %v2185
    %2212 = vmatprep.subr.mxu0 0.0
    %2213 = vmatpush1.msra.mxu0 %v2186
    %2214 = vmatprep.subr.mxu0 0.0
    %2215 = vmatpush1.msra.mxu0 %v2187
    %2216 = vmatprep.subr.mxu0 0.0
    %2217 = vmatpush1.msra.mxu0 %v2188
    %2218 = vmatprep.subr.mxu0 0.0
    %2219 = vmatpush1.msra.mxu0 %v2189
    %2220 = vmatprep.subr.mxu0 0.0
    %2221 = vmatpush1.msra.mxu0 %v2190
    %2222 = vmatprep.subr.mxu0 0.0
    %2223 = vmatpush1.msra.mxu0 %v2191
    %2224 = vmatprep.subr.mxu0 0.0
    %2225 = vmatpush1.msra.mxu0 %v2192
    %2226 = vmatprep.subr.mxu0 0.0
    %2227 = vmatpush1.msra.mxu0 %v2193
    %2228 = vmatprep.subr.mxu0 0.0
    %2229 = vmatpush1.msra.mxu0 %v2194
    %2230 = vmatprep.subr.mxu0 0.0
    %2231 = vmatpush1.msra.mxu0 %v2195
    %2232 = vmatprep.subr.mxu0 0.0
    %2233 = vmatpush1.msra.mxu0 %v2196
    %2234 = vmatprep.subr.mxu0 0.0
    %2235 = vmatpush1.msra.mxu0 %v2197
    %2236 = vmatprep.subr.mxu0 0.0
    %2237 = vmatpush1.msra.mxu0 %v2198
    %2238 = vmatprep.subr.mxu0 0.0
    %2239 = vmatpush1.msra.mxu0 0.0
    %2240 = vmatprep.subr.mxu0 0.0
    %2241 = vmatpush1.msra.mxu0 0.0
    %2242 = vmatprep.subr.mxu0 0.0
    %2243 = vmatpush1.msra.mxu0 0.0
    %2244 = vmatprep.subr.mxu0 0.0
    %2245 = vmatpush1.msra.mxu0 0.0
    %2246 = vmatprep.subr.mxu0 0.0
    %2247 = vmatpush1.msra.mxu0 0.0
    %2248 = vmatprep.subr.mxu0 0.0
    %2249 = vmatpush1.msra.mxu0 0.0
    %2250 = vmatprep.subr.mxu0 0.0
    %2251 = vmatpush1.msra.mxu0 0.0
    %2252 = vmatprep.subr.mxu0 0.0
    %2253 = vmatpush1.msra.mxu0 0.0
    %2254 = vmatprep.subr.mxu0 0.0
    %2255 = vmatpush1.msra.mxu0 0.0
    %2256 = vmatprep.subr.mxu0 0.0
    %2257 = vmatpush1.msra.mxu0 0.0
    %2258 = vmatprep.subr.mxu0 0.0
    %2259 = vmatpush1.msra.mxu0 0.0
    %2260 = vmatprep.subr.mxu0 0.0
    %2261 = vmatpush1.msra.mxu0 0.0
    %2262 = vmatprep.subr.mxu0 0.0
    %2263 = vmatpush1.msra.mxu0 0.0
    %2264 = vmatprep.subr.mxu0 0.0
    %2265 = vmatpush1.msra.mxu0 0.0
    %2266 = vmatprep.subr.mxu0 0.0
    %2267 = vmatpush1.msra.mxu0 0.0
    %2268 = vmatprep.subr.mxu0 0.0
    %2269 = vmatpush1.msra.mxu0 0.0
    %2270 = vmatprep.mubr.f32.mxu0 0.0
    %2271 = vmatmul.mubr.f32.gmra.mrb[0].mxu0 %v2181
    %v2272 = vpop.f32.mrb[0].mxu0
    %v2273 = vadd.f32 %v2204, %v2272
    %v2274 = vpop.f32.mrb[0].mxu0
    %2275 = vmatprep.mubr.f32.mxu0 0.0
    %2276 = vmatmul.mubr.f32.gmra.mrb[0].mxu0 %v2182
    %v2277 = vpop.f32.mrb[0].mxu0
    %v2278 = vadd.f32 %v2204, %v2277
    %v2279 = vpop.f32.mrb[0].mxu0
    %2280 = vdwg.mxu0
    %v2281 = vadd.f32 %v2087, %v2273
    %v2282 = vadd.f32 %v2088, %v2278
    %v2283 = vld [vmem:[%s16] sm:$0x1]
    %v2284 = vld [vmem:[%s17] sm:$0x1]
    %v2285 = vsel %vm98, %v2281, 0.0
    %2286 = vadd.xlane.f32.xlu0 %v2285
    %v2287 = vpop.xlane.xlu0 %2286
    %v2288 = vsel %vm98, %v2282, 0.0
    %2289 = vadd.xlane.f32.xlu0 %v2288
    %v2290 = vpop.xlane.xlu0 %2289
    %v2291 = vmul.f32 %v2287, %v2052
    %v2292 = vmul.f32 %v2290, %v2052
    %v2293 = vsub.f32 %v2281, %v2291
    %v2294 = vsub.f32 %v2282, %v2292
    %v2295 = vmul.f32 %v2293, %v2293
    %v2296 = vmul.f32 %v2294, %v2294
    %v2297 = vsel %vm98, %v2295, 0.0
    %2298 = vadd.xlane.f32.xlu0 %v2297
    %v2299 = vpop.xlane.xlu0 %2298
    %v2300 = vsel %vm98, %v2296, 0.0
    %2301 = vadd.xlane.f32.xlu0 %v2300
    %v2302 = vpop.xlane.xlu0 %2301
    %v2303 = vmul.f32 %v2299, %v2052
    %v2304 = vmul.f32 %v2302, %v2052
    %v2305 = vadd.f32 %v2303, 1e-05
    %v2306 = vadd.f32 %v2304, 1e-05
    %v2307 = vrsqrt.pop %v2305
    %v2308 = vrsqrt.pop %v2306
    %v2309 = vmul.f32 %v2293, %v2307
    %v2310 = vmul.f32 %v2294, %v2308
    %v2312 = vlaneseq
    %v2313 = vshrl.u32 %v2312, 7
    %v2314 = vsub.s32 0, %v2313
    %v2315 = vrot.slane %v2283, %v2314
    %v2317 = vmul.f32 %v2309, %v2315
    %v2318 = vmul.f32 %v2310, %v2315
    %v2320 = vlaneseq
    %v2321 = vshrl.u32 %v2320, 7
    %v2322 = vsub.s32 0, %v2321
    %v2323 = vrot.slane %v2284, %v2322
    %v2325 = vadd.f32 %v2317, %v2323
    %v2326 = vadd.f32 %v2318, %v2323
    %2327 = vst.msk [vmem:[#allocation7] sm:$0xff] %vm98, %v2325
    %2328 = vst.msk [vmem:[#allocation7 + $0x8] sm:$0xff] %vm98, %v2326
    // Predicated region
    $region82: #{tpu_custom_call.1} parent=1 // pred_check
      _
    $region83: #{tpu_custom_call.1} parent=1 // pred_check_branch
      %2330 = sbr.rel (0) target = $region85
    $region84: #{tpu_custom_call.1} parent=1 // pred_region
      %s2332 = ssub.s32 256, 256
      %2333 = vsyncadd [#allocation4], %s2332
      %s2334 = sshll.u32 [#allocation7], 4
      %s2335 = int_to_ptr.vmem [resolvable:$true] %s2334
      %2340 = dma.vmem_to_hbm [thread:$0]  %s2335, 256, %s18, [#allocation4], 128, 128, 8
    $region85: #{tpu_custom_call.1} parent=1 // pred_fallthru
      _
    // Predicated region
    $region86: #{tpu_custom_call.1} parent=1 // pred_check
      _
    $region87: #{tpu_custom_call.1} parent=1 // pred_check_branch
      %2342 = sbr.rel (0) target = $region89
    $region88: #{tpu_custom_call.1} parent=1 // pred_region
      %2343 = dma.done [#allocation4], 256
    $region89: #{tpu_custom_call.1} parent=1 // pred_fallthru
      _
    %2344 = vsyncpa [#allocation3], 1
    %2345 = vsyncpa [#allocation4], 1
    %2346 = vsyncpa [#allocation5], 1

</llo_original>
